<compile_context>
chip_gen: v6e
topology: v6e:2x2x1
jax: 0.10.0
libtpu: 0.0.40
codegen_flags: <defaults>
</compile_context>

<pallas_src>
import math

import jax
import jax.numpy as jnp
from jax.experimental import pallas as pl
from jax.experimental.pallas import tpu as pltpu

# Logical layer sizes (matching the PyTorch module).
D_IN, D_H1, D_H2, D_OUT = 784, 300, 100, 10
# Lane-padded sizes (multiples of 128).
P_H1, P_H2, P_OUT = 384, 128, 128


def _round_up(n, m):
    return ((n + m - 1) // m) * m


def _lenet_kernel(x_ref, w1_ref, b1_ref, w2_ref, b2_ref, w3_ref, b3_ref, out_ref):
    # x tile: (TB, 784) f32 streamed from HBM; cast to bf16 in-kernel (VPU op
    # hidden under the DMA). Weights bf16 / biases f32, all VMEM-resident.
    x = x_ref[...].astype(jnp.bfloat16)
    h1 = jnp.dot(x, w1_ref[...], preferred_element_type=jnp.float32)          # (TB, 384)
    h1 = jnp.maximum(h1 + b1_ref[...], 0.0)                                    # ReLU (f32)
    h2 = jnp.dot(h1.astype(jnp.bfloat16), w2_ref[...],
                 preferred_element_type=jnp.float32)                           # (TB, 128)
    h2 = jnp.maximum(h2 + b2_ref[...], 0.0)                                    # ReLU (f32)
    logit = jnp.dot(h2.astype(jnp.bfloat16), w3_ref[...],
                    preferred_element_type=jnp.float32)                        # (TB, 128)
    out_ref[...] = (logit + b3_ref[...]).astype(out_ref.dtype)                 # bf16 lane-dense store


def lenet_mnist_forward(x, packed_params, *, tb=1024):
    """x: (B, 1, 28, 28) float32 NCHW. packed_params from pack_params().
    Returns logits (B, 10) float32."""
    (w1, b1), (w2, b2), (w3, b3) = packed_params
    B = x.shape[0]
    x_flat = x.reshape(B, -1)              # torch.flatten(x, 1); free metadata op, stays f32
    assert x_flat.shape[1] == D_IN

    # Batch tiling.
    if B <= 8:
        # Single full-array block: exempt from the (8,128) rule, no padding needed.
        tb_eff = B
    else:
        tb_eff = min(tb, 2048)
        # Keep grid >= 2 so the "parallel" batch axis can use both v7x TensorCores.
        tb_eff = min(tb_eff, _round_up(pl.cdiv(B, 2), 8))
        tb_eff = max(8, (tb_eff // 8) * 8)   # sublane multiple
    grid = (pl.cdiv(B, tb_eff),)             # ragged tail handled by Pallas masking

    def resident(a):  # whole array, same block every grid step -> stays in VMEM
        return pl.BlockSpec(a.shape, lambda i: (0,) * a.ndim)

    flops = 2 * B * (D_IN * D_H1 + D_H1 * D_H2 + D_H2 * D_OUT)
    bytes_accessed = (
        x_flat.size * 4                                   # f32 activations in
        + (w1.size + w2.size + w3.size) * 2               # bf16 weights
        + (b1.size + b2.size + b3.size) * 4               # f32 biases
        + B * P_OUT * 2                                   # bf16 lane-dense output
    )

    out = pl.pallas_call(
        _lenet_kernel,
        out_shape=jax.ShapeDtypeStruct((B, P_OUT), jnp.bfloat16),
        grid=grid,
        in_specs=[
            pl.BlockSpec((tb_eff, D_IN), lambda i: (i, 0)),   # x tiles stream through
            resident(w1), resident(b1),
            resident(w2), resident(b2),
            resident(w3), resident(b3),
        ],
        out_specs=pl.BlockSpec((tb_eff, P_OUT), lambda i: (i, 0)),
        compiler_params=pltpu.CompilerParams(
            dimension_semantics=("parallel",),
            vmem_limit_bytes=32 << 20,
        ),
        cost_estimate=pl.CostEstimate(
            flops=flops, transcendentals=0, bytes_accessed=bytes_accessed),
    )(x_flat, w1, b1, w2, b2, w3, b3)

    return out[:, :D_OUT].astype(jnp.float32)


def init_params(key):
    """xavier_normal_ weights (std = sqrt(2/(fan_in+fan_out))), zero biases,
    stored as (in, out) f32 — matching the PyTorch module's init."""
    dims = [(D_IN, D_H1), (D_H1, D_H2), (D_H2, D_OUT)]
    keys = jax.random.split(key, len(dims))
    params = []
    for k, (fan_in, fan_out) in zip(keys, dims):
        std = math.sqrt(2.0 / (fan_in + fan_out))
        w = std * jax.random.normal(k, (fan_in, fan_out), dtype=jnp.float32)
        b = jnp.zeros((fan_out,), dtype=jnp.float32)
        params.append((w, b))
    return params


def pack_params(params):
    """One-time packing: zero-pad every weight/bias lane dim to a multiple of
    128 (and W2/W3 input dims to match), cast weights to bf16. Zero padding is
    numerically inert (zero weight columns + zero bias + ReLU)."""
    (w1, b1), (w2, b2), (w3, b3) = params

    def pad_w(w, rows, cols):
        return jnp.pad(w, ((0, rows - w.shape[0]), (0, cols - w.shape[1])))

    w1p = pad_w(w1, D_IN, P_H1).astype(jnp.bfloat16)
    w2p = pad_w(w2, P_H1, P_H2).astype(jnp.bfloat16)
    w3p = pad_w(w3, P_H2, P_OUT).astype(jnp.bfloat16)
    b1p = jnp.pad(b1, (0, P_H1 - D_H1)).reshape(1, P_H1).astype(jnp.float32)
    b2p = jnp.pad(b2, (0, P_H2 - D_H2)).reshape(1, P_H2).astype(jnp.float32)
    b3p = jnp.pad(b3, (0, P_OUT - D_OUT)).reshape(1, P_OUT).astype(jnp.float32)
    return ((w1p, b1p), (w2p, b2p), (w3p, b3p))


def _reference(x, params):
    """bf16-MXU-emulating reference (same numerics as the kernel, incl. the
    bf16 output round-trip)."""
    (w1, b1), (w2, b2), (w3, b3) = params
    h = x.reshape(x.shape[0], -1).astype(jnp.bfloat16)
    h = jnp.maximum(jnp.dot(h, w1.astype(jnp.bfloat16),
                            preferred_element_type=jnp.float32) + b1, 0.0)
    h = jnp.maximum(jnp.dot(h.astype(jnp.bfloat16), w2.astype(jnp.bfloat16),
                            preferred_element_type=jnp.float32) + b2, 0.0)
    out = jnp.dot(h.astype(jnp.bfloat16), w3.astype(jnp.bfloat16),
                  preferred_element_type=jnp.float32) + b3
    return out.astype(jnp.bfloat16).astype(jnp.float32)


if __name__ == "__main__":
    key = jax.random.PRNGKey(0)
    k_params, k_x = jax.random.split(key)
    params = init_params(k_params)
    packed = pack_params(params)

    B = 2
    x = jax.random.normal(k_x, (B, 1, 28, 28), dtype=jnp.float32)  # NCHW, MNIST-sized

    logits = lenet_mnist_forward(x, packed)
    jax.block_until_ready(logits)

    ref = _reference(x, params)
    assert logits.shape == (B, 10)
    assert jnp.allclose(logits, ref, atol=1e-2, rtol=1e-2)

    print("KERNEL_OK")
</pallas_src>

<mosaic_0001>
module attributes {stable_mosaic.version = 11 : i64} {
  func.func @_lenet_kernel(%arg0: i32, %arg1: memref<2x784xf32, #tpu.memory_space<vmem>>, %arg2: memref<784x384xbf16, #tpu.memory_space<vmem>>, %arg3: memref<1x384xf32, #tpu.memory_space<vmem>>, %arg4: memref<384x128xbf16, #tpu.memory_space<vmem>>, %arg5: memref<1x128xf32, #tpu.memory_space<vmem>>, %arg6: memref<128x128xbf16, #tpu.memory_space<vmem>>, %arg7: memref<1x128xf32, #tpu.memory_space<vmem>>, %arg8: memref<2x128xbf16, #tpu.memory_space<vmem>>) attributes {dimension_semantics = [#tpu.dimension_semantics<parallel>], iteration_bounds = array<i64: 1>, scalar_prefetch = 0 : i64, scratch_operands = 0 : i64, tpu.core_type = #tpu.core_type<tc>, window_params = [{transform_indices = @transform_0, window_bounds = array<i64: 2, 784>}, {pipeline_mode = #tpu.pipeline_mode<synchronous>, transform_indices = @transform_1, window_bounds = array<i64: 784, 384>}, {pipeline_mode = #tpu.pipeline_mode<synchronous>, transform_indices = @transform_2, window_bounds = array<i64: 1, 384>}, {pipeline_mode = #tpu.pipeline_mode<synchronous>, transform_indices = @transform_3, window_bounds = array<i64: 384, 128>}, {pipeline_mode = #tpu.pipeline_mode<synchronous>, transform_indices = @transform_4, window_bounds = array<i64: 1, 128>}, {pipeline_mode = #tpu.pipeline_mode<synchronous>, transform_indices = @transform_5, window_bounds = array<i64: 128, 128>}, {pipeline_mode = #tpu.pipeline_mode<synchronous>, transform_indices = @transform_6, window_bounds = array<i64: 1, 128>}, {transform_indices = @transform_7, window_bounds = array<i64: 2, 128>}]} {
    %c0 = arith.constant 0 : index
    %c0_0 = arith.constant 0 : index
    %0 = vector.load %arg1[%c0, %c0_0] : memref<2x784xf32, #tpu.memory_space<vmem>>, vector<2x784xf32>
    %1 = arith.truncf %0 : vector<2x784xf32> to vector<2x784xbf16>
    %c0_1 = arith.constant 0 : index
    %c0_2 = arith.constant 0 : index
    %2 = vector.load %arg2[%c0_1, %c0_2] : memref<784x384xbf16, #tpu.memory_space<vmem>>, vector<784x384xbf16>
    %cst = arith.constant dense<0.000000e+00> : vector<2x384xf32>
    %3 = tpu.matmul %1, %2, %cst {dimension_numbers = #tpu.dot_dimension_numbers<[1], [0], [0], [1], [0, 0, 1, 1], [], []>} : vector<2x784xbf16>, vector<784x384xbf16>, vector<2x384xf32> -> vector<2x384xf32>
    %c0_3 = arith.constant 0 : index
    %c0_4 = arith.constant 0 : index
    %4 = vector.load %arg3[%c0_3, %c0_4] : memref<1x384xf32, #tpu.memory_space<vmem>>, vector<1x384xf32>
    %5 = vector.broadcast %4 : vector<1x384xf32> to vector<2x384xf32>
    %6 = arith.addf %3, %5 : vector<2x384xf32>
    %cst_5 = arith.constant 0.000000e+00 : f32
    %7 = vector.broadcast %cst_5 : f32 to vector<2x384xf32>
    %8 = arith.maximumf %6, %7 : vector<2x384xf32>
    %9 = arith.truncf %8 : vector<2x384xf32> to vector<2x384xbf16>
    %c0_6 = arith.constant 0 : index
    %c0_7 = arith.constant 0 : index
    %10 = vector.load %arg4[%c0_6, %c0_7] : memref<384x128xbf16, #tpu.memory_space<vmem>>, vector<384x128xbf16>
    %cst_8 = arith.constant dense<0.000000e+00> : vector<2x128xf32>
    %11 = tpu.matmul %9, %10, %cst_8 {dimension_numbers = #tpu.dot_dimension_numbers<[1], [0], [0], [1], [0, 0, 1, 1], [], []>} : vector<2x384xbf16>, vector<384x128xbf16>, vector<2x128xf32> -> vector<2x128xf32>
    %c0_9 = arith.constant 0 : index
    %c0_10 = arith.constant 0 : index
    %12 = vector.load %arg5[%c0_9, %c0_10] : memref<1x128xf32, #tpu.memory_space<vmem>>, vector<1x128xf32>
    %13 = vector.broadcast %12 : vector<1x128xf32> to vector<2x128xf32>
    %14 = arith.addf %11, %13 : vector<2x128xf32>
    %cst_11 = arith.constant 0.000000e+00 : f32
    %15 = vector.broadcast %cst_11 : f32 to vector<2x128xf32>
    %16 = arith.maximumf %14, %15 : vector<2x128xf32>
    %17 = arith.truncf %16 : vector<2x128xf32> to vector<2x128xbf16>
    %c0_12 = arith.constant 0 : index
    %c0_13 = arith.constant 0 : index
    %18 = vector.load %arg6[%c0_12, %c0_13] : memref<128x128xbf16, #tpu.memory_space<vmem>>, vector<128x128xbf16>
    %cst_14 = arith.constant dense<0.000000e+00> : vector<2x128xf32>
    %19 = tpu.matmul %17, %18, %cst_14 {dimension_numbers = #tpu.dot_dimension_numbers<[1], [0], [0], [1], [0, 0, 1, 1], [], []>} : vector<2x128xbf16>, vector<128x128xbf16>, vector<2x128xf32> -> vector<2x128xf32>
    %c0_15 = arith.constant 0 : index
    %c0_16 = arith.constant 0 : index
    %20 = vector.load %arg7[%c0_15, %c0_16] : memref<1x128xf32, #tpu.memory_space<vmem>>, vector<1x128xf32>
    %21 = vector.broadcast %20 : vector<1x128xf32> to vector<2x128xf32>
    %22 = arith.addf %19, %21 : vector<2x128xf32>
    %23 = arith.truncf %22 : vector<2x128xf32> to vector<2x128xbf16>
    %c0_17 = arith.constant 0 : index
    %c0_18 = arith.constant 0 : index
    %24 = vector.load %arg8[%c0_17, %c0_18] : memref<2x128xbf16, #tpu.memory_space<vmem>>, vector<2x128xbf16>
    tpu.vector_store %arg8[%c0_17, %c0_18], %23 {strides = array<i32>} : memref<2x128xbf16, #tpu.memory_space<vmem>>, vector<2x128xbf16>,
    return
  }
  func.func @transform_0(%arg0: i32) -> (i32, i32) {
    %c0_i32 = arith.constant 0 : i32
    %c0_i32_0 = arith.constant 0 : i32
    return %arg0, %c0_i32 : i32, i32
  }
  func.func @transform_1(%arg0: i32) -> (i32, i32) {
    %c0_i32 = arith.constant 0 : i32
    %c0_i32_0 = arith.constant 0 : i32
    %c0_i32_1 = arith.constant 0 : i32
    return %c0_i32, %c0_i32_0 : i32, i32
  }
  func.func @transform_2(%arg0: i32) -> (i32, i32) {
    %c0_i32 = arith.constant 0 : i32
    %c0_i32_0 = arith.constant 0 : i32
    %c0_i32_1 = arith.constant 0 : i32
    return %c0_i32, %c0_i32_0 : i32, i32
  }
  func.func @transform_3(%arg0: i32) -> (i32, i32) {
    %c0_i32 = arith.constant 0 : i32
    %c0_i32_0 = arith.constant 0 : i32
    %c0_i32_1 = arith.constant 0 : i32
    return %c0_i32, %c0_i32_0 : i32, i32
  }
  func.func @transform_4(%arg0: i32) -> (i32, i32) {
    %c0_i32 = arith.constant 0 : i32
    %c0_i32_0 = arith.constant 0 : i32
    %c0_i32_1 = arith.constant 0 : i32
    return %c0_i32, %c0_i32_0 : i32, i32
  }
  func.func @transform_5(%arg0: i32) -> (i32, i32) {
    %c0_i32 = arith.constant 0 : i32
    %c0_i32_0 = arith.constant 0 : i32
    %c0_i32_1 = arith.constant 0 : i32
    return %c0_i32, %c0_i32_0 : i32, i32
  }
  func.func @transform_6(%arg0: i32) -> (i32, i32) {
    %c0_i32 = arith.constant 0 : i32
    %c0_i32_0 = arith.constant 0 : i32
    %c0_i32_1 = arith.constant 0 : i32
    return %c0_i32, %c0_i32_0 : i32, i32
  }
  func.func @transform_7(%arg0: i32) -> (i32, i32) {
    %c0_i32 = arith.constant 0 : i32
    %c0_i32_0 = arith.constant 0 : i32
    return %arg0, %c0_i32 : i32, i32
  }
}

</mosaic_0001>

<llo_original>
// kernel: tpu_custom_call.1
$region0: #{tpu_custom_call.1}
  #allocation0 [shape = 'u32[]', space=smem, size = 0x4, offset = 0x4, fixed_abs, tag = 'smem constant byte address 0x4 - core index']
  #allocation1 [shape = 'u32[144,128]{1,0:T(1,128)}', space=vmem, size = 0x12000, scoped, tag = 'internal scratch']
  %s0 = inlined_call_operand.hbm [shape: f32[2,784], index: 0, kind: input, shape index: {}]
  %s1 = inlined_call_operand.hbm [shape: bf16[784,384], index: 1, kind: input, shape index: {}]
  %s2 = inlined_call_operand.vmem [shape: f32[1,384], index: 2, kind: input, shape index: {}]
  %s3 = inlined_call_operand.hbm [shape: bf16[384,128], index: 3, kind: input, shape index: {}]
  %s4 = inlined_call_operand.vmem [shape: f32[1,128], index: 4, kind: input, shape index: {}]
  %s5 = inlined_call_operand.hbm [shape: bf16[128,128], index: 5, kind: input, shape index: {}]
  %s6 = inlined_call_operand.vmem [shape: f32[1,128], index: 6, kind: input, shape index: {}]
  %s7 = inlined_call_operand.hbm [shape: bf16[2,128], index: 7, kind: output, shape index: {}]
  %s8 = sld [smem:[#allocation0]]
  $region54: #{tpu_custom_call.1} parent=0
    _
  %s10 = ssub.s32 1, %s8
  %s11 = scalar_select 0, %s10, %s8
  $region1: #{tpu_custom_call.1} parent=0
    #allocation2 [shape = 'u8[7168]{0}', space=vmem, size = 0x1c00, scoped, tag = 'input window, operand 0, single buffered']
    #allocation3 [shape = 's32[1]{0}', space=sflag, size = 0x4, scoped, tag = 'scoped memory for tpu_custom_call.1']
    #allocation4 [shape = 's32[1]{0}', space=sflag, size = 0x4, scoped, tag = 'scoped memory for tpu_custom_call.1']
    #allocation5 [shape = 'u8[602112]{0}', space=vmem, size = 0x93000, scoped, tag = 'input window, operand 1, single buffered']
    #allocation6 [shape = 's32[1]{0}', space=sflag, size = 0x4, scoped, tag = 'scoped memory for tpu_custom_call.1']
    #allocation7 [shape = 'u8[98304]{0}', space=vmem, size = 0x18000, scoped, tag = 'input window, operand 3, single buffered']
    #allocation8 [shape = 'u8[32768]{0}', space=vmem, size = 0x8000, scoped, tag = 'input window, operand 5, single buffered']
    #allocation9 [shape = 's32[1]{0}', space=sflag, size = 0x4, scoped, tag = 'scoped memory for tpu_custom_call.1']
    #allocation10 [shape = 'u8[512]{0}', space=vmem, size = 0x400, scoped, tag = 'output window, operand 0, single buffered']
    %12 = vsyncpa [#allocation3], 0
    %13 = vsyncpa [#allocation6], 0
    %14 = vsyncpa [#allocation9], 0
    %15 = vsyncpa [#allocation4], 0
    // Predicated region
    $region2: #{tpu_custom_call.1} parent=1 // pred_check
      _
    $region3: #{tpu_custom_call.1} parent=1 // pred_check_branch
      %17 = sbr.rel (0) target = $region5
    $region4: #{tpu_custom_call.1} parent=1 // pred_region
      %s19 = ssub.s32 224, 224
      %20 = vsyncadd [#allocation3], %s19
      %s22 = sshll.u32 [#allocation2], 4
      %s23 = int_to_ptr.vmem [resolvable:$true] %s22
      %25 = dma.hbm_to_vmem [thread:$0]  %s0, 224, %s23, [#allocation3]
    $region5: #{tpu_custom_call.1} parent=1 // pred_fallthru
      _
    // Predicated region
    $region6: #{tpu_custom_call.1} parent=1 // pred_check
      _
    $region7: #{tpu_custom_call.1} parent=1 // pred_check_branch
      %27 = sbr.rel (0) target = $region9
    $region8: #{tpu_custom_call.1} parent=1 // pred_region
      %s29 = ssub.s32 18816, 18816
      %30 = vsyncadd [#allocation6], %s29
      %s31 = sshll.u32 [#allocation5], 4
      %s32 = int_to_ptr.vmem [resolvable:$true] %s31
      %37 = dma.hbm_to_vmem [thread:$0]  %s1, 18816, %s32, [#allocation6], 192, 192, 12
    $region9: #{tpu_custom_call.1} parent=1 // pred_fallthru
      _
    // Predicated region
    $region10: #{tpu_custom_call.1} parent=1 // pred_check
      _
    $region11: #{tpu_custom_call.1} parent=1 // pred_check_branch
      %39 = sbr.rel (0) target = $region13
    $region12: #{tpu_custom_call.1} parent=1 // pred_region
      _
    $region13: #{tpu_custom_call.1} parent=1 // pred_fallthru
      _
    // Predicated region
    $region14: #{tpu_custom_call.1} parent=1 // pred_check
      _
    $region15: #{tpu_custom_call.1} parent=1 // pred_check_branch
      %41 = sbr.rel (0) target = $region17
    $region16: #{tpu_custom_call.1} parent=1 // pred_region
      %s43 = ssub.s32 3072, 3072
      %44 = vsyncadd [#allocation6], %s43
      %s45 = sshll.u32 [#allocation7], 4
      %s46 = int_to_ptr.vmem [resolvable:$true] %s45
      %51 = dma.hbm_to_vmem [thread:$0]  %s3, 3072, %s46, [#allocation6], 64, 64, 4
    $region17: #{tpu_custom_call.1} parent=1 // pred_fallthru
      _
    // Predicated region
    $region18: #{tpu_custom_call.1} parent=1 // pred_check
      _
    $region19: #{tpu_custom_call.1} parent=1 // pred_check_branch
      %53 = sbr.rel (0) target = $region21
    $region20: #{tpu_custom_call.1} parent=1 // pred_region
      _
    $region21: #{tpu_custom_call.1} parent=1 // pred_fallthru
      _
    // Predicated region
    $region22: #{tpu_custom_call.1} parent=1 // pred_check
      _
    $region23: #{tpu_custom_call.1} parent=1 // pred_check_branch
      %55 = sbr.rel (0) target = $region25
    $region24: #{tpu_custom_call.1} parent=1 // pred_region
      %s57 = ssub.s32 1024, 1024
      %58 = vsyncadd [#allocation9], %s57
      %s59 = sshll.u32 [#allocation8], 4
      %s60 = int_to_ptr.vmem [resolvable:$true] %s59
      %65 = dma.hbm_to_vmem [thread:$0]  %s5, 1024, %s60, [#allocation9], 64, 64, 4
    $region25: #{tpu_custom_call.1} parent=1 // pred_fallthru
      _
    // Predicated region
    $region26: #{tpu_custom_call.1} parent=1 // pred_check
      _
    $region27: #{tpu_custom_call.1} parent=1 // pred_check_branch
      %67 = sbr.rel (0) target = $region29
    $region28: #{tpu_custom_call.1} parent=1 // pred_region
      _
    $region29: #{tpu_custom_call.1} parent=1 // pred_fallthru
      _
    // Predicated region
    $region30: #{tpu_custom_call.1} parent=1 // pred_check
      _
    $region31: #{tpu_custom_call.1} parent=1 // pred_check_branch
      %69 = sbr.rel (0) target = $region33
    $region32: #{tpu_custom_call.1} parent=1 // pred_region
      %70 = dma.done [#allocation3], 224
    $region33: #{tpu_custom_call.1} parent=1 // pred_fallthru
      _
    // Predicated region
    $region34: #{tpu_custom_call.1} parent=1 // pred_check
      _
    $region35: #{tpu_custom_call.1} parent=1 // pred_check_branch
      %72 = sbr.rel (0) target = $region37
    $region36: #{tpu_custom_call.1} parent=1 // pred_region
      %73 = dma.done [#allocation6], 18816
    $region37: #{tpu_custom_call.1} parent=1 // pred_fallthru
      _
    // Predicated region
    $region38: #{tpu_custom_call.1} parent=1 // pred_check
      _
    $region39: #{tpu_custom_call.1} parent=1 // pred_check_branch
      %75 = sbr.rel (0) target = $region41
    $region40: #{tpu_custom_call.1} parent=1 // pred_region
      %76 = dma.done [#allocation6], 3072
    $region41: #{tpu_custom_call.1} parent=1 // pred_fallthru
      _
    // Predicated region
    $region42: #{tpu_custom_call.1} parent=1 // pred_check
      _
    $region43: #{tpu_custom_call.1} parent=1 // pred_check_branch
      %78 = sbr.rel (0) target = $region45
    $region44: #{tpu_custom_call.1} parent=1 // pred_region
      %79 = dma.done [#allocation9], 1024
    $region45: #{tpu_custom_call.1} parent=1 // pred_fallthru
      _
    %v81 = vld [vmem:[#allocation2] sm:$0xff]
    %v82 = vld [vmem:[#allocation2 + $0x8] sm:$0x3f]
    %v85 = vcombine.high %v81, %v81
    %v87 = vunpack.c.l.s4 1983009808
    %v88 = vunpack.c.0.s8 %v87
    %v89 = vlaneseq
    %v90 = vshrl.u32 %v89, 7
    %v91 = vsub.s32 %v88, %v90
    %v92 = vrot.slane %v81, %v91
    %v94 = vunpack.c.l.s4 1983009808
    %v95 = vunpack.c.0.s8 %v94
    %v96 = vlaneseq
    %v97 = vshrl.u32 %v96, 7
    %v98 = vsub.s32 %v95, %v97
    %v99 = vrot.slane %v85, %v98
    %v100 = vcombine.high %v92, %v92
    %v101 = vcombine.high %v99, %v99
    %v102 = vcombine.high %v82, %v82
    %v104 = vunpack.c.l.s4 1983009808
    %v105 = vunpack.c.0.s8 %v104
    %v106 = vlaneseq
    %v107 = vshrl.u32 %v106, 7
    %v108 = vsub.s32 %v105, %v107
    %v109 = vrot.slane %v82, %v108
    %v111 = vunpack.c.l.s4 1983009808
    %v112 = vunpack.c.0.s8 %v111
    %v113 = vlaneseq
    %v114 = vshrl.u32 %v113, 7
    %v115 = vsub.s32 %v112, %v114
    %v116 = vrot.slane %v102, %v115
    %v117 = vcombine.high %v109, %v109
    %v125 = vpack.c.bf16 %v92, %v92
    %v126 = vpack.c.bf16 %v100, %v100
    %v127 = vpack.c.bf16 %v99, %v99
    %v128 = vpack.c.bf16 %v101, %v101
    %v129 = vpack.c.bf16 %v109, %v109
    %v130 = vpack.c.bf16 %v117, %v117
    %v131 = vpack.c.bf16 %v116, %v116
    %v132 = vld [vmem:[#allocation5] sm:$0xff]
    %v133 = vld [vmem:[#allocation5 + $0x8] sm:$0xf]
    %v134 = vld [vmem:[#allocation5 + $0xc] sm:$0xff]
    %v135 = vld [vmem:[#allocation5 + $0x14] sm:$0xf]
    %v136 = vld [vmem:[#allocation5 + $0x18] sm:$0xff]
    %v137 = vld [vmem:[#allocation5 + $0x20] sm:$0xf]
    %v138 = vld [vmem:[#allocation5 + $0x24] sm:$0xff]
    %v139 = vld [vmem:[#allocation5 + $0x2c] sm:$0xf]
    %v140 = vld [vmem:[#allocation5 + $0x30] sm:$0xff]
    %v141 = vld [vmem:[#allocation5 + $0x38] sm:$0xf]
    %v142 = vld [vmem:[#allocation5 + $0x3c] sm:$0xff]
    %v143 = vld [vmem:[#allocation5 + $0x44] sm:$0xf]
    %v144 = vld [vmem:[#allocation5 + $0x48] sm:$0xff]
    %v145 = vld [vmem:[#allocation5 + $0x50] sm:$0xf]
    %v146 = vld [vmem:[#allocation5 + $0x54] sm:$0xff]
    %v147 = vld [vmem:[#allocation5 + $0x5c] sm:$0xf]
    %v148 = vld [vmem:[#allocation5 + $0x60] sm:$0xff]
    %v149 = vld [vmem:[#allocation5 + $0x68] sm:$0xf]
    %v150 = vld [vmem:[#allocation5 + $0x6c] sm:$0xff]
    %v151 = vld [vmem:[#allocation5 + $0x74] sm:$0xf]
    %v152 = vld [vmem:[#allocation5 + $0x78] sm:$0xff]
    %v153 = vld [vmem:[#allocation5 + $0x80] sm:$0xf]
    %v154 = vld [vmem:[#allocation5 + $0x84] sm:$0xff]
    %v155 = vld [vmem:[#allocation5 + $0x8c] sm:$0xf]
    %v156 = vld [vmem:[#allocation5 + $0x90] sm:$0xff]
    %v157 = vld [vmem:[#allocation5 + $0x98] sm:$0xf]
    %v158 = vld [vmem:[#allocation5 + $0x9c] sm:$0xff]
    %v159 = vld [vmem:[#allocation5 + $0xa4] sm:$0xf]
    %v160 = vld [vmem:[#allocation5 + $0xa8] sm:$0xff]
    %v161 = vld [vmem:[#allocation5 + $0xb0] sm:$0xf]
    %v162 = vld [vmem:[#allocation5 + $0xb4] sm:$0xff]
    %v163 = vld [vmem:[#allocation5 + $0xbc] sm:$0xf]
    %v164 = vld [vmem:[#allocation5 + $0xc0] sm:$0xff]
    %v165 = vld [vmem:[#allocation5 + $0xc8] sm:$0xf]
    %v166 = vld [vmem:[#allocation5 + $0xcc] sm:$0xff]
    %v167 = vld [vmem:[#allocation5 + $0xd4] sm:$0xf]
    %v168 = vld [vmem:[#allocation5 + $0xd8] sm:$0xff]
    %v169 = vld [vmem:[#allocation5 + $0xe0] sm:$0xf]
    %v170 = vld [vmem:[#allocation5 + $0xe4] sm:$0xff]
    %v171 = vld [vmem:[#allocation5 + $0xec] sm:$0xf]
    %v172 = vld [vmem:[#allocation5 + $0xf0] sm:$0xff]
    %v173 = vld [vmem:[#allocation5 + $0xf8] sm:$0xf]
    %v174 = vld [vmem:[#allocation5 + $0xfc] sm:$0xff]
    %v175 = vld [vmem:[#allocation5 + $0x104] sm:$0xf]
    %v176 = vld [vmem:[#allocation5 + $0x108] sm:$0xff]
    %v177 = vld [vmem:[#allocation5 + $0x110] sm:$0xf]
    %v178 = vld [vmem:[#allocation5 + $0x114] sm:$0xff]
    %v179 = vld [vmem:[#allocation5 + $0x11c] sm:$0xf]
    %v180 = vld [vmem:[#allocation5 + $0x120] sm:$0xff]
    %v181 = vld [vmem:[#allocation5 + $0x128] sm:$0xf]
    %v182 = vld [vmem:[#allocation5 + $0x12c] sm:$0xff]
    %v183 = vld [vmem:[#allocation5 + $0x134] sm:$0xf]
    %v184 = vld [vmem:[#allocation5 + $0x138] sm:$0xff]
    %v185 = vld [vmem:[#allocation5 + $0x140] sm:$0xf]
    %v186 = vld [vmem:[#allocation5 + $0x144] sm:$0xff]
    %v187 = vld [vmem:[#allocation5 + $0x14c] sm:$0xf]
    %v188 = vld [vmem:[#allocation5 + $0x150] sm:$0xff]
    %v189 = vld [vmem:[#allocation5 + $0x158] sm:$0xf]
    %v190 = vld [vmem:[#allocation5 + $0x15c] sm:$0xff]
    %v191 = vld [vmem:[#allocation5 + $0x164] sm:$0xf]
    %v192 = vld [vmem:[#allocation5 + $0x168] sm:$0xff]
    %v193 = vld [vmem:[#allocation5 + $0x170] sm:$0xf]
    %v194 = vld [vmem:[#allocation5 + $0x174] sm:$0xff]
    %v195 = vld [vmem:[#allocation5 + $0x17c] sm:$0xf]
    %v196 = vld [vmem:[#allocation5 + $0x180] sm:$0xff]
    %v197 = vld [vmem:[#allocation5 + $0x188] sm:$0xf]
    %v198 = vld [vmem:[#allocation5 + $0x18c] sm:$0xff]
    %v199 = vld [vmem:[#allocation5 + $0x194] sm:$0xf]
    %v200 = vld [vmem:[#allocation5 + $0x198] sm:$0xff]
    %v201 = vld [vmem:[#allocation5 + $0x1a0] sm:$0xf]
    %v202 = vld [vmem:[#allocation5 + $0x1a4] sm:$0xff]
    %v203 = vld [vmem:[#allocation5 + $0x1ac] sm:$0xf]
    %v204 = vld [vmem:[#allocation5 + $0x1b0] sm:$0xff]
    %v205 = vld [vmem:[#allocation5 + $0x1b8] sm:$0xf]
    %v206 = vld [vmem:[#allocation5 + $0x1bc] sm:$0xff]
    %v207 = vld [vmem:[#allocation5 + $0x1c4] sm:$0xf]
    %v208 = vld [vmem:[#allocation5 + $0x1c8] sm:$0xff]
    %v209 = vld [vmem:[#allocation5 + $0x1d0] sm:$0xf]
    %v210 = vld [vmem:[#allocation5 + $0x1d4] sm:$0xff]
    %v211 = vld [vmem:[#allocation5 + $0x1dc] sm:$0xf]
    %v212 = vld [vmem:[#allocation5 + $0x1e0] sm:$0xff]
    %v213 = vld [vmem:[#allocation5 + $0x1e8] sm:$0xf]
    %v214 = vld [vmem:[#allocation5 + $0x1ec] sm:$0xff]
    %v215 = vld [vmem:[#allocation5 + $0x1f4] sm:$0xf]
    %v216 = vld [vmem:[#allocation5 + $0x1f8] sm:$0xff]
    %v217 = vld [vmem:[#allocation5 + $0x200] sm:$0xf]
    %v218 = vld [vmem:[#allocation5 + $0x204] sm:$0xff]
    %v219 = vld [vmem:[#allocation5 + $0x20c] sm:$0xf]
    %v220 = vld [vmem:[#allocation5 + $0x210] sm:$0xff]
    %v221 = vld [vmem:[#allocation5 + $0x218] sm:$0xf]
    %v222 = vld [vmem:[#allocation5 + $0x21c] sm:$0xff]
    %v223 = vld [vmem:[#allocation5 + $0x224] sm:$0xf]
    %v224 = vld [vmem:[#allocation5 + $0x228] sm:$0xff]
    %v225 = vld [vmem:[#allocation5 + $0x230] sm:$0xf]
    %v226 = vld [vmem:[#allocation5 + $0x234] sm:$0xff]
    %v227 = vld [vmem:[#allocation5 + $0x23c] sm:$0xf]
    %v228 = vld [vmem:[#allocation5 + $0x240] sm:$0xff]
    %v229 = vld [vmem:[#allocation5 + $0x248] sm:$0xf]
    %v230 = vld [vmem:[#allocation5 + $0x24c] sm:$0xff]
    %v231 = vld [vmem:[#allocation5 + $0x254] sm:$0xf]
    %v232 = vld [vmem:[#allocation5 + $0x258] sm:$0xff]
    %v233 = vld [vmem:[#allocation5 + $0x260] sm:$0xf]
    %v234 = vld [vmem:[#allocation5 + $0x264] sm:$0xff]
    %v235 = vld [vmem:[#allocation5 + $0x26c] sm:$0xf]
    %v236 = vld [vmem:[#allocation5 + $0x270] sm:$0xff]
    %v237 = vld [vmem:[#allocation5 + $0x278] sm:$0xf]
    %v238 = vld [vmem:[#allocation5 + $0x27c] sm:$0xff]
    %v239 = vld [vmem:[#allocation5 + $0x284] sm:$0xf]
    %v240 = vld [vmem:[#allocation5 + $0x288] sm:$0xff]
    %v241 = vld [vmem:[#allocation5 + $0x290] sm:$0xf]
    %v242 = vld [vmem:[#allocation5 + $0x294] sm:$0xff]
    %v243 = vld [vmem:[#allocation5 + $0x29c] sm:$0xf]
    %v244 = vld [vmem:[#allocation5 + $0x2a0] sm:$0xff]
    %v245 = vld [vmem:[#allocation5 + $0x2a8] sm:$0xf]
    %v246 = vld [vmem:[#allocation5 + $0x2ac] sm:$0xff]
    %v247 = vld [vmem:[#allocation5 + $0x2b4] sm:$0xf]
    %v248 = vld [vmem:[#allocation5 + $0x2b8] sm:$0xff]
    %v249 = vld [vmem:[#allocation5 + $0x2c0] sm:$0xf]
    %v250 = vld [vmem:[#allocation5 + $0x2c4] sm:$0xff]
    %v251 = vld [vmem:[#allocation5 + $0x2cc] sm:$0xf]
    %v252 = vld [vmem:[#allocation5 + $0x2d0] sm:$0xff]
    %v253 = vld [vmem:[#allocation5 + $0x2d8] sm:$0xf]
    %v254 = vld [vmem:[#allocation5 + $0x2dc] sm:$0xff]
    %v255 = vld [vmem:[#allocation5 + $0x2e4] sm:$0xf]
    %v256 = vld [vmem:[#allocation5 + $0x2e8] sm:$0xff]
    %v257 = vld [vmem:[#allocation5 + $0x2f0] sm:$0xf]
    %v258 = vld [vmem:[#allocation5 + $0x2f4] sm:$0xff]
    %v259 = vld [vmem:[#allocation5 + $0x2fc] sm:$0xf]
    %v260 = vld [vmem:[#allocation5 + $0x300] sm:$0xff]
    %v261 = vld [vmem:[#allocation5 + $0x308] sm:$0xf]
    %v262 = vld [vmem:[#allocation5 + $0x30c] sm:$0xff]
    %v263 = vld [vmem:[#allocation5 + $0x314] sm:$0xf]
    %v264 = vld [vmem:[#allocation5 + $0x318] sm:$0xff]
    %v265 = vld [vmem:[#allocation5 + $0x320] sm:$0xf]
    %v266 = vld [vmem:[#allocation5 + $0x324] sm:$0xff]
    %v267 = vld [vmem:[#allocation5 + $0x32c] sm:$0xf]
    %v268 = vld [vmem:[#allocation5 + $0x330] sm:$0xff]
    %v269 = vld [vmem:[#allocation5 + $0x338] sm:$0xf]
    %v270 = vld [vmem:[#allocation5 + $0x33c] sm:$0xff]
    %v271 = vld [vmem:[#allocation5 + $0x344] sm:$0xf]
    %v272 = vld [vmem:[#allocation5 + $0x348] sm:$0xff]
    %v273 = vld [vmem:[#allocation5 + $0x350] sm:$0xf]
    %v274 = vld [vmem:[#allocation5 + $0x354] sm:$0xff]
    %v275 = vld [vmem:[#allocation5 + $0x35c] sm:$0xf]
    %v276 = vld [vmem:[#allocation5 + $0x360] sm:$0xff]
    %v277 = vld [vmem:[#allocation5 + $0x368] sm:$0xf]
    %v278 = vld [vmem:[#allocation5 + $0x36c] sm:$0xff]
    %v279 = vld [vmem:[#allocation5 + $0x374] sm:$0xf]
    %v280 = vld [vmem:[#allocation5 + $0x378] sm:$0xff]
    %v281 = vld [vmem:[#allocation5 + $0x380] sm:$0xf]
    %v282 = vld [vmem:[#allocation5 + $0x384] sm:$0xff]
    %v283 = vld [vmem:[#allocation5 + $0x38c] sm:$0xf]
    %v284 = vld [vmem:[#allocation5 + $0x390] sm:$0xff]
    %v285 = vld [vmem:[#allocation5 + $0x398] sm:$0xf]
    %v286 = vld [vmem:[#allocation5 + $0x39c] sm:$0xff]
    %v287 = vld [vmem:[#allocation5 + $0x3a4] sm:$0xf]
    %v288 = vld [vmem:[#allocation5 + $0x3a8] sm:$0xff]
    %v289 = vld [vmem:[#allocation5 + $0x3b0] sm:$0xf]
    %v290 = vld [vmem:[#allocation5 + $0x3b4] sm:$0xff]
    %v291 = vld [vmem:[#allocation5 + $0x3bc] sm:$0xf]
    %v292 = vld [vmem:[#allocation5 + $0x3c0] sm:$0xff]
    %v293 = vld [vmem:[#allocation5 + $0x3c8] sm:$0xf]
    %v294 = vld [vmem:[#allocation5 + $0x3cc] sm:$0xff]
    %v295 = vld [vmem:[#allocation5 + $0x3d4] sm:$0xf]
    %v296 = vld [vmem:[#allocation5 + $0x3d8] sm:$0xff]
    %v297 = vld [vmem:[#allocation5 + $0x3e0] sm:$0xf]
    %v298 = vld [vmem:[#allocation5 + $0x3e4] sm:$0xff]
    %v299 = vld [vmem:[#allocation5 + $0x3ec] sm:$0xf]
    %v300 = vld [vmem:[#allocation5 + $0x3f0] sm:$0xff]
    %v301 = vld [vmem:[#allocation5 + $0x3f8] sm:$0xf]
    %v302 = vld [vmem:[#allocation5 + $0x3fc] sm:$0xff]
    %v303 = vld [vmem:[#allocation5 + $0x404] sm:$0xf]
    %v304 = vld [vmem:[#allocation5 + $0x408] sm:$0xff]
    %v305 = vld [vmem:[#allocation5 + $0x410] sm:$0xf]
    %v306 = vld [vmem:[#allocation5 + $0x414] sm:$0xff]
    %v307 = vld [vmem:[#allocation5 + $0x41c] sm:$0xf]
    %v308 = vld [vmem:[#allocation5 + $0x420] sm:$0xff]
    %v309 = vld [vmem:[#allocation5 + $0x428] sm:$0xf]
    %v310 = vld [vmem:[#allocation5 + $0x42c] sm:$0xff]
    %v311 = vld [vmem:[#allocation5 + $0x434] sm:$0xf]
    %v312 = vld [vmem:[#allocation5 + $0x438] sm:$0xff]
    %v313 = vld [vmem:[#allocation5 + $0x440] sm:$0xf]
    %v314 = vld [vmem:[#allocation5 + $0x444] sm:$0xff]
    %v315 = vld [vmem:[#allocation5 + $0x44c] sm:$0xf]
    %v316 = vld [vmem:[#allocation5 + $0x450] sm:$0xff]
    %v317 = vld [vmem:[#allocation5 + $0x458] sm:$0xf]
    %v318 = vld [vmem:[#allocation5 + $0x45c] sm:$0xff]
    %v319 = vld [vmem:[#allocation5 + $0x464] sm:$0xf]
    %v320 = vld [vmem:[#allocation5 + $0x468] sm:$0xff]
    %v321 = vld [vmem:[#allocation5 + $0x470] sm:$0xf]
    %v322 = vld [vmem:[#allocation5 + $0x474] sm:$0xff]
    %v323 = vld [vmem:[#allocation5 + $0x47c] sm:$0xf]
    %v324 = vld [vmem:[#allocation5 + $0x480] sm:$0xff]
    %v325 = vld [vmem:[#allocation5 + $0x488] sm:$0xf]
    %v326 = vld [vmem:[#allocation5 + $0x48c] sm:$0xff]
    %v327 = vld [vmem:[#allocation5 + $0x494] sm:$0xf]
    %v328 = vld [vmem:[%s2] sm:$0x7]
    %v330 = vlaneseq
    %v331 = vshrl.u32 %v330, 7
    %v332 = vsub.s32 0, %v331
    %v333 = vrot.slane %v328, %v332
    %v334 = vlaneseq
    %v335 = vshrl.u32 %v334, 7
    %v336 = vsub.s32 1, %v335
    %v337 = vrot.slane %v328, %v336
    %v338 = vlaneseq
    %v339 = vshrl.u32 %v338, 7
    %v340 = vsub.s32 2, %v339
    %v341 = vrot.slane %v328, %v340
    %v541 = vunpack.c.l.b16 %v132
    %v542 = vunpack.c.h.b16 %v132
    %v543 = vunpack.c.l.b16 %v133
    %v544 = vunpack.c.l.b16 %v134
    %v545 = vunpack.c.h.b16 %v134
    %v546 = vunpack.c.l.b16 %v135
    %v547 = vunpack.c.l.b16 %v136
    %v548 = vunpack.c.h.b16 %v136
    %v549 = vunpack.c.l.b16 %v137
    %v550 = vunpack.c.l.b16 %v138
    %v551 = vunpack.c.h.b16 %v138
    %v552 = vunpack.c.l.b16 %v139
    %v553 = vunpack.c.l.b16 %v140
    %v554 = vunpack.c.h.b16 %v140
    %v555 = vunpack.c.l.b16 %v141
    %v556 = vunpack.c.l.b16 %v142
    %v557 = vunpack.c.h.b16 %v142
    %v558 = vunpack.c.l.b16 %v143
    %v559 = vunpack.c.l.b16 %v144
    %v560 = vunpack.c.h.b16 %v144
    %v561 = vunpack.c.l.b16 %v145
    %v562 = vunpack.c.l.b16 %v146
    %v563 = vunpack.c.h.b16 %v146
    %v564 = vunpack.c.l.b16 %v147
    %v565 = vunpack.c.l.b16 %v148
    %v566 = vunpack.c.h.b16 %v148
    %v567 = vunpack.c.l.b16 %v149
    %v568 = vunpack.c.l.b16 %v150
    %v569 = vunpack.c.h.b16 %v150
    %v570 = vunpack.c.l.b16 %v151
    %v571 = vunpack.c.l.b16 %v152
    %v572 = vunpack.c.h.b16 %v152
    %v573 = vunpack.c.l.b16 %v153
    %v574 = vunpack.c.l.b16 %v154
    %v575 = vunpack.c.h.b16 %v154
    %v576 = vunpack.c.l.b16 %v155
    %v577 = vunpack.c.l.b16 %v156
    %v578 = vunpack.c.h.b16 %v156
    %v579 = vunpack.c.l.b16 %v157
    %v580 = vunpack.c.l.b16 %v158
    %v581 = vunpack.c.h.b16 %v158
    %v582 = vunpack.c.l.b16 %v159
    %v583 = vunpack.c.l.b16 %v160
    %v584 = vunpack.c.h.b16 %v160
    %v585 = vunpack.c.l.b16 %v161
    %v586 = vunpack.c.l.b16 %v162
    %v587 = vunpack.c.h.b16 %v162
    %v588 = vunpack.c.l.b16 %v163
    %v589 = vunpack.c.l.b16 %v164
    %v590 = vunpack.c.h.b16 %v164
    %v591 = vunpack.c.l.b16 %v165
    %v592 = vunpack.c.l.b16 %v166
    %v593 = vunpack.c.h.b16 %v166
    %v594 = vunpack.c.l.b16 %v167
    %v595 = vunpack.c.l.b16 %v168
    %v596 = vunpack.c.h.b16 %v168
    %v597 = vunpack.c.l.b16 %v169
    %v598 = vunpack.c.l.b16 %v170
    %v599 = vunpack.c.h.b16 %v170
    %v600 = vunpack.c.l.b16 %v171
    %v601 = vunpack.c.l.b16 %v172
    %v602 = vunpack.c.h.b16 %v172
    %v603 = vunpack.c.l.b16 %v173
    %v604 = vunpack.c.l.b16 %v174
    %v605 = vunpack.c.h.b16 %v174
    %v606 = vunpack.c.l.b16 %v175
    %v607 = vunpack.c.l.b16 %v176
    %v608 = vunpack.c.h.b16 %v176
    %v609 = vunpack.c.l.b16 %v177
    %v610 = vunpack.c.l.b16 %v178
    %v611 = vunpack.c.h.b16 %v178
    %v612 = vunpack.c.l.b16 %v179
    %v613 = vunpack.c.l.b16 %v180
    %v614 = vunpack.c.h.b16 %v180
    %v615 = vunpack.c.l.b16 %v181
    %v616 = vunpack.c.l.b16 %v182
    %v617 = vunpack.c.h.b16 %v182
    %v618 = vunpack.c.l.b16 %v183
    %v619 = vunpack.c.l.b16 %v184
    %v620 = vunpack.c.h.b16 %v184
    %v621 = vunpack.c.l.b16 %v185
    %v622 = vunpack.c.l.b16 %v186
    %v623 = vunpack.c.h.b16 %v186
    %v624 = vunpack.c.l.b16 %v187
    %v625 = vunpack.c.l.b16 %v188
    %v626 = vunpack.c.h.b16 %v188
    %v627 = vunpack.c.l.b16 %v189
    %v628 = vunpack.c.l.b16 %v190
    %v629 = vunpack.c.h.b16 %v190
    %v630 = vunpack.c.l.b16 %v191
    %v631 = vunpack.c.l.b16 %v192
    %v632 = vunpack.c.h.b16 %v192
    %v633 = vunpack.c.l.b16 %v193
    %v634 = vunpack.c.l.b16 %v194
    %v635 = vunpack.c.h.b16 %v194
    %v636 = vunpack.c.l.b16 %v195
    %v637 = vunpack.c.l.b16 %v196
    %v638 = vunpack.c.h.b16 %v196
    %v639 = vunpack.c.l.b16 %v197
    %v640 = vunpack.c.l.b16 %v198
    %v641 = vunpack.c.h.b16 %v198
    %v642 = vunpack.c.l.b16 %v199
    %v643 = vunpack.c.l.b16 %v200
    %v644 = vunpack.c.h.b16 %v200
    %v645 = vunpack.c.l.b16 %v201
    %v646 = vunpack.c.l.b16 %v202
    %v647 = vunpack.c.h.b16 %v202
    %v648 = vunpack.c.l.b16 %v203
    %v649 = vunpack.c.l.b16 %v204
    %v650 = vunpack.c.h.b16 %v204
    %v651 = vunpack.c.l.b16 %v205
    %v652 = vunpack.c.l.b16 %v206
    %v653 = vunpack.c.h.b16 %v206
    %v654 = vunpack.c.l.b16 %v207
    %v655 = vunpack.c.l.b16 %v208
    %v656 = vunpack.c.h.b16 %v208
    %v657 = vunpack.c.l.b16 %v209
    %v658 = vunpack.c.l.b16 %v210
    %v659 = vunpack.c.h.b16 %v210
    %v660 = vunpack.c.l.b16 %v211
    %v661 = vunpack.c.l.b16 %v212
    %v662 = vunpack.c.h.b16 %v212
    %v663 = vunpack.c.l.b16 %v213
    %v664 = vunpack.c.l.b16 %v214
    %v665 = vunpack.c.h.b16 %v214
    %v666 = vunpack.c.l.b16 %v215
    %v667 = vunpack.c.l.b16 %v216
    %v668 = vunpack.c.h.b16 %v216
    %v669 = vunpack.c.l.b16 %v217
    %v670 = vunpack.c.l.b16 %v218
    %v671 = vunpack.c.h.b16 %v218
    %v672 = vunpack.c.l.b16 %v219
    %v673 = vunpack.c.l.b16 %v220
    %v674 = vunpack.c.h.b16 %v220
    %v675 = vunpack.c.l.b16 %v221
    %v676 = vunpack.c.l.b16 %v222
    %v677 = vunpack.c.h.b16 %v222
    %v678 = vunpack.c.l.b16 %v223
    %v679 = vunpack.c.l.b16 %v224
    %v680 = vunpack.c.h.b16 %v224
    %v681 = vunpack.c.l.b16 %v225
    %v682 = vunpack.c.l.b16 %v226
    %v683 = vunpack.c.h.b16 %v226
    %v684 = vunpack.c.l.b16 %v227
    %v685 = vunpack.c.l.b16 %v228
    %v686 = vunpack.c.h.b16 %v228
    %v687 = vunpack.c.l.b16 %v229
    %v688 = vunpack.c.l.b16 %v230
    %v689 = vunpack.c.h.b16 %v230
    %v690 = vunpack.c.l.b16 %v231
    %v691 = vunpack.c.l.b16 %v232
    %v692 = vunpack.c.h.b16 %v232
    %v693 = vunpack.c.l.b16 %v233
    %v694 = vunpack.c.l.b16 %v234
    %v695 = vunpack.c.h.b16 %v234
    %v696 = vunpack.c.l.b16 %v235
    %v697 = vunpack.c.l.b16 %v236
    %v698 = vunpack.c.h.b16 %v236
    %v699 = vunpack.c.l.b16 %v237
    %v700 = vunpack.c.l.b16 %v238
    %v701 = vunpack.c.h.b16 %v238
    %v702 = vunpack.c.l.b16 %v239
    %v703 = vunpack.c.l.b16 %v240
    %v704 = vunpack.c.h.b16 %v240
    %v705 = vunpack.c.l.b16 %v241
    %v706 = vunpack.c.l.b16 %v242
    %v707 = vunpack.c.h.b16 %v242
    %v708 = vunpack.c.l.b16 %v243
    %v709 = vunpack.c.l.b16 %v244
    %v710 = vunpack.c.h.b16 %v244
    %v711 = vunpack.c.l.b16 %v245
    %v712 = vunpack.c.l.b16 %v246
    %v713 = vunpack.c.h.b16 %v246
    %v714 = vunpack.c.l.b16 %v247
    %v715 = vunpack.c.l.b16 %v248
    %v716 = vunpack.c.h.b16 %v248
    %v717 = vunpack.c.l.b16 %v249
    %v718 = vunpack.c.l.b16 %v250
    %v719 = vunpack.c.h.b16 %v250
    %v720 = vunpack.c.l.b16 %v251
    %v721 = vunpack.c.l.b16 %v252
    %v722 = vunpack.c.h.b16 %v252
    %v723 = vunpack.c.l.b16 %v253
    %v724 = vunpack.c.l.b16 %v254
    %v725 = vunpack.c.h.b16 %v254
    %v726 = vunpack.c.l.b16 %v255
    %v727 = vunpack.c.l.b16 %v256
    %v728 = vunpack.c.h.b16 %v256
    %v729 = vunpack.c.l.b16 %v257
    %v730 = vunpack.c.l.b16 %v258
    %v731 = vunpack.c.h.b16 %v258
    %v732 = vunpack.c.l.b16 %v259
    %v733 = vunpack.c.l.b16 %v260
    %v734 = vunpack.c.h.b16 %v260
    %v735 = vunpack.c.l.b16 %v261
    %v736 = vunpack.c.l.b16 %v262
    %v737 = vunpack.c.h.b16 %v262
    %v738 = vunpack.c.l.b16 %v263
    %v739 = vunpack.c.l.b16 %v264
    %v740 = vunpack.c.h.b16 %v264
    %v741 = vunpack.c.l.b16 %v265
    %v742 = vunpack.c.l.b16 %v266
    %v743 = vunpack.c.h.b16 %v266
    %v744 = vunpack.c.l.b16 %v267
    %v745 = vunpack.c.l.b16 %v268
    %v746 = vunpack.c.h.b16 %v268
    %v747 = vunpack.c.l.b16 %v269
    %v748 = vunpack.c.l.b16 %v270
    %v749 = vunpack.c.h.b16 %v270
    %v750 = vunpack.c.l.b16 %v271
    %v751 = vunpack.c.l.b16 %v272
    %v752 = vunpack.c.h.b16 %v272
    %v753 = vunpack.c.l.b16 %v273
    %v754 = vunpack.c.l.b16 %v274
    %v755 = vunpack.c.h.b16 %v274
    %v756 = vunpack.c.l.b16 %v275
    %v757 = vunpack.c.l.b16 %v276
    %v758 = vunpack.c.h.b16 %v276
    %v759 = vunpack.c.l.b16 %v277
    %v760 = vunpack.c.l.b16 %v278
    %v761 = vunpack.c.h.b16 %v278
    %v762 = vunpack.c.l.b16 %v279
    %v763 = vunpack.c.l.b16 %v280
    %v764 = vunpack.c.h.b16 %v280
    %v765 = vunpack.c.l.b16 %v281
    %v766 = vunpack.c.l.b16 %v282
    %v767 = vunpack.c.h.b16 %v282
    %v768 = vunpack.c.l.b16 %v283
    %v769 = vunpack.c.l.b16 %v284
    %v770 = vunpack.c.h.b16 %v284
    %v771 = vunpack.c.l.b16 %v285
    %v772 = vunpack.c.l.b16 %v286
    %v773 = vunpack.c.h.b16 %v286
    %v774 = vunpack.c.l.b16 %v287
    %v775 = vunpack.c.l.b16 %v288
    %v776 = vunpack.c.h.b16 %v288
    %v777 = vunpack.c.l.b16 %v289
    %v778 = vunpack.c.l.b16 %v290
    %v779 = vunpack.c.h.b16 %v290
    %v780 = vunpack.c.l.b16 %v291
    %v781 = vunpack.c.l.b16 %v292
    %v782 = vunpack.c.h.b16 %v292
    %v783 = vunpack.c.l.b16 %v293
    %v784 = vunpack.c.l.b16 %v294
    %v785 = vunpack.c.h.b16 %v294
    %v786 = vunpack.c.l.b16 %v295
    %v787 = vunpack.c.l.b16 %v296
    %v788 = vunpack.c.h.b16 %v296
    %v789 = vunpack.c.l.b16 %v297
    %v790 = vunpack.c.l.b16 %v298
    %v791 = vunpack.c.h.b16 %v298
    %v792 = vunpack.c.l.b16 %v299
    %v793 = vunpack.c.l.b16 %v300
    %v794 = vunpack.c.h.b16 %v300
    %v795 = vunpack.c.l.b16 %v301
    %v796 = vunpack.c.l.b16 %v302
    %v797 = vunpack.c.h.b16 %v302
    %v798 = vunpack.c.l.b16 %v303
    %v799 = vunpack.c.l.b16 %v304
    %v800 = vunpack.c.h.b16 %v304
    %v801 = vunpack.c.l.b16 %v305
    %v802 = vunpack.c.l.b16 %v306
    %v803 = vunpack.c.h.b16 %v306
    %v804 = vunpack.c.l.b16 %v307
    %v805 = vunpack.c.l.b16 %v308
    %v806 = vunpack.c.h.b16 %v308
    %v807 = vunpack.c.l.b16 %v309
    %v808 = vunpack.c.l.b16 %v310
    %v809 = vunpack.c.h.b16 %v310
    %v810 = vunpack.c.l.b16 %v311
    %v811 = vunpack.c.l.b16 %v312
    %v812 = vunpack.c.h.b16 %v312
    %v813 = vunpack.c.l.b16 %v313
    %v814 = vunpack.c.l.b16 %v314
    %v815 = vunpack.c.h.b16 %v314
    %v816 = vunpack.c.l.b16 %v315
    %v817 = vunpack.c.l.b16 %v316
    %v818 = vunpack.c.h.b16 %v316
    %v819 = vunpack.c.l.b16 %v317
    %v820 = vunpack.c.l.b16 %v318
    %v821 = vunpack.c.h.b16 %v318
    %v822 = vunpack.c.l.b16 %v319
    %v823 = vunpack.c.l.b16 %v320
    %v824 = vunpack.c.h.b16 %v320
    %v825 = vunpack.c.l.b16 %v321
    %v826 = vunpack.c.l.b16 %v322
    %v827 = vunpack.c.h.b16 %v322
    %v828 = vunpack.c.l.b16 %v323
    %v829 = vunpack.c.l.b16 %v324
    %v830 = vunpack.c.h.b16 %v324
    %v831 = vunpack.c.l.b16 %v325
    %v832 = vunpack.c.l.b16 %v326
    %v833 = vunpack.c.h.b16 %v326
    %v834 = vunpack.c.l.b16 %v327
    %v835 = vpack.c.b16 %v544, %v541
    %v836 = vpack.c.b16 %v545, %v542
    %v837 = vpack.c.b16 %v546, %v543
    %v838 = vpack.c.b16 %v550, %v547
    %v839 = vpack.c.b16 %v551, %v548
    %v840 = vpack.c.b16 %v552, %v549
    %v841 = vpack.c.b16 %v556, %v553
    %v842 = vpack.c.b16 %v557, %v554
    %v843 = vpack.c.b16 %v558, %v555
    %v844 = vpack.c.b16 %v562, %v559
    %v845 = vpack.c.b16 %v563, %v560
    %v846 = vpack.c.b16 %v564, %v561
    %v847 = vpack.c.b16 %v568, %v565
    %v848 = vpack.c.b16 %v569, %v566
    %v849 = vpack.c.b16 %v570, %v567
    %v850 = vpack.c.b16 %v574, %v571
    %v851 = vpack.c.b16 %v575, %v572
    %v852 = vpack.c.b16 %v576, %v573
    %v853 = vpack.c.b16 %v580, %v577
    %v854 = vpack.c.b16 %v581, %v578
    %v855 = vpack.c.b16 %v582, %v579
    %v856 = vpack.c.b16 %v586, %v583
    %v857 = vpack.c.b16 %v587, %v584
    %v858 = vpack.c.b16 %v588, %v585
    %v859 = vpack.c.b16 %v592, %v589
    %v860 = vpack.c.b16 %v593, %v590
    %v861 = vpack.c.b16 %v594, %v591
    %v862 = vpack.c.b16 %v598, %v595
    %v863 = vpack.c.b16 %v599, %v596
    %v864 = vpack.c.b16 %v600, %v597
    %v865 = vpack.c.b16 %v604, %v601
    %v866 = vpack.c.b16 %v605, %v602
    %v867 = vpack.c.b16 %v606, %v603
    %v868 = vpack.c.b16 %v610, %v607
    %v869 = vpack.c.b16 %v611, %v608
    %v870 = vpack.c.b16 %v612, %v609
    %v871 = vpack.c.b16 %v616, %v613
    %v872 = vpack.c.b16 %v617, %v614
    %v873 = vpack.c.b16 %v618, %v615
    %v874 = vpack.c.b16 %v622, %v619
    %v875 = vpack.c.b16 %v623, %v620
    %v876 = vpack.c.b16 %v624, %v621
    %v877 = vpack.c.b16 %v628, %v625
    %v878 = vpack.c.b16 %v629, %v626
    %v879 = vpack.c.b16 %v630, %v627
    %v880 = vpack.c.b16 %v634, %v631
    %v881 = vpack.c.b16 %v635, %v632
    %v882 = vpack.c.b16 %v636, %v633
    %v883 = vpack.c.b16 %v640, %v637
    %v884 = vpack.c.b16 %v641, %v638
    %v885 = vpack.c.b16 %v642, %v639
    %v886 = vpack.c.b16 %v646, %v643
    %v887 = vpack.c.b16 %v647, %v644
    %v888 = vpack.c.b16 %v648, %v645
    %v889 = vpack.c.b16 %v652, %v649
    %v890 = vpack.c.b16 %v653, %v650
    %v891 = vpack.c.b16 %v654, %v651
    %v892 = vpack.c.b16 %v658, %v655
    %v893 = vpack.c.b16 %v659, %v656
    %v894 = vpack.c.b16 %v660, %v657
    %v895 = vpack.c.b16 %v664, %v661
    %v896 = vpack.c.b16 %v665, %v662
    %v897 = vpack.c.b16 %v666, %v663
    %v898 = vpack.c.b16 %v670, %v667
    %v899 = vpack.c.b16 %v671, %v668
    %v900 = vpack.c.b16 %v672, %v669
    %v901 = vpack.c.b16 %v676, %v673
    %v902 = vpack.c.b16 %v677, %v674
    %v903 = vpack.c.b16 %v678, %v675
    %v904 = vpack.c.b16 %v682, %v679
    %v905 = vpack.c.b16 %v683, %v680
    %v906 = vpack.c.b16 %v684, %v681
    %v907 = vpack.c.b16 %v688, %v685
    %v908 = vpack.c.b16 %v689, %v686
    %v909 = vpack.c.b16 %v690, %v687
    %v910 = vpack.c.b16 %v694, %v691
    %v911 = vpack.c.b16 %v695, %v692
    %v912 = vpack.c.b16 %v696, %v693
    %v913 = vpack.c.b16 %v700, %v697
    %v914 = vpack.c.b16 %v701, %v698
    %v915 = vpack.c.b16 %v702, %v699
    %v916 = vpack.c.b16 %v706, %v703
    %v917 = vpack.c.b16 %v707, %v704
    %v918 = vpack.c.b16 %v708, %v705
    %v919 = vpack.c.b16 %v712, %v709
    %v920 = vpack.c.b16 %v713, %v710
    %v921 = vpack.c.b16 %v714, %v711
    %v922 = vpack.c.b16 %v718, %v715
    %v923 = vpack.c.b16 %v719, %v716
    %v924 = vpack.c.b16 %v720, %v717
    %v925 = vpack.c.b16 %v724, %v721
    %v926 = vpack.c.b16 %v725, %v722
    %v927 = vpack.c.b16 %v726, %v723
    %v928 = vpack.c.b16 %v730, %v727
    %v929 = vpack.c.b16 %v731, %v728
    %v930 = vpack.c.b16 %v732, %v729
    %v931 = vpack.c.b16 %v736, %v733
    %v932 = vpack.c.b16 %v737, %v734
    %v933 = vpack.c.b16 %v738, %v735
    %v934 = vpack.c.b16 %v742, %v739
    %v935 = vpack.c.b16 %v743, %v740
    %v936 = vpack.c.b16 %v744, %v741
    %v937 = vpack.c.b16 %v748, %v745
    %v938 = vpack.c.b16 %v749, %v746
    %v939 = vpack.c.b16 %v750, %v747
    %v940 = vpack.c.b16 %v754, %v751
    %v941 = vpack.c.b16 %v755, %v752
    %v942 = vpack.c.b16 %v756, %v753
    %v943 = vpack.c.b16 %v760, %v757
    %v944 = vpack.c.b16 %v761, %v758
    %v945 = vpack.c.b16 %v762, %v759
    %v946 = vpack.c.b16 %v766, %v763
    %v947 = vpack.c.b16 %v767, %v764
    %v948 = vpack.c.b16 %v768, %v765
    %v949 = vpack.c.b16 %v772, %v769
    %v950 = vpack.c.b16 %v773, %v770
    %v951 = vpack.c.b16 %v774, %v771
    %v952 = vpack.c.b16 %v778, %v775
    %v953 = vpack.c.b16 %v779, %v776
    %v954 = vpack.c.b16 %v780, %v777
    %v955 = vpack.c.b16 %v784, %v781
    %v956 = vpack.c.b16 %v785, %v782
    %v957 = vpack.c.b16 %v786, %v783
    %v958 = vpack.c.b16 %v790, %v787
    %v959 = vpack.c.b16 %v791, %v788
    %v960 = vpack.c.b16 %v792, %v789
    %v961 = vpack.c.b16 %v796, %v793
    %v962 = vpack.c.b16 %v797, %v794
    %v963 = vpack.c.b16 %v798, %v795
    %v964 = vpack.c.b16 %v802, %v799
    %v965 = vpack.c.b16 %v803, %v800
    %v966 = vpack.c.b16 %v804, %v801
    %v967 = vpack.c.b16 %v808, %v805
    %v968 = vpack.c.b16 %v809, %v806
    %v969 = vpack.c.b16 %v810, %v807
    %v970 = vpack.c.b16 %v814, %v811
    %v971 = vpack.c.b16 %v815, %v812
    %v972 = vpack.c.b16 %v816, %v813
    %v973 = vpack.c.b16 %v820, %v817
    %v974 = vpack.c.b16 %v821, %v818
    %v975 = vpack.c.b16 %v822, %v819
    %v976 = vpack.c.b16 %v826, %v823
    %v977 = vpack.c.b16 %v827, %v824
    %v978 = vpack.c.b16 %v828, %v825
    %v979 = vpack.c.b16 %v832, %v829
    %v980 = vpack.c.b16 %v833, %v830
    %v981 = vpack.c.b16 %v834, %v831
    %vm1129 = vcmask 130048
    %v1131 = vsel %vm1129, %v131, 0
    %1133 = vmatprep.subr.bf16.mxu0 %v857
    %1134 = vmatpush1.bf16.msra.mxu0 %v856
    %1135 = vmatprep.subr.bf16.mxu0 %v854
    %1136 = vmatpush1.bf16.msra.mxu0 %v853
    %1137 = vmatprep.subr.bf16.mxu0 %v851
    %1138 = vmatpush1.bf16.msra.mxu0 %v850
    %1139 = vmatprep.subr.bf16.mxu0 %v848
    %1140 = vmatpush1.bf16.msra.mxu0 %v847
    %1141 = vmatprep.subr.bf16.mxu0 %v845
    %1142 = vmatpush1.bf16.msra.mxu0 %v844
    %1143 = vmatprep.subr.bf16.mxu0 %v842
    %1144 = vmatpush1.bf16.msra.mxu0 %v841
    %1145 = vmatprep.subr.bf16.mxu0 %v839
    %1146 = vmatpush1.bf16.msra.mxu0 %v838
    %1147 = vmatprep.subr.bf16.mxu0 %v836
    %1148 = vmatpush1.bf16.msra.mxu0 %v835
    %1149 = vmatprep.subr.bf16.mxu0 %v881
    %1150 = vmatpush2.bf16.msra.mxu0 %v880
    %1151 = vmatprep.subr.bf16.mxu0 %v878
    %1152 = vmatpush2.bf16.msra.mxu0 %v877
    %1153 = vmatprep.subr.bf16.mxu0 %v875
    %1154 = vmatpush2.bf16.msra.mxu0 %v874
    %1155 = vmatprep.subr.bf16.mxu0 %v872
    %1156 = vmatpush2.bf16.msra.mxu0 %v871
    %1157 = vmatprep.subr.bf16.mxu0 %v869
    %1158 = vmatpush2.bf16.msra.mxu0 %v868
    %1159 = vmatprep.subr.bf16.mxu0 %v866
    %1160 = vmatpush2.bf16.msra.mxu0 %v865
    %1161 = vmatprep.subr.bf16.mxu0 %v863
    %1162 = vmatpush2.bf16.msra.mxu0 %v862
    %1163 = vmatprep.subr.bf16.mxu0 %v860
    %1164 = vmatpush2.bf16.msra.mxu0 %v859
    %1165 = vmatprep.mubr.bf16.mxu0 %v126
    %1166 = vmatmul.mubr.bf16.gmra.mxu0 %v125
    %v1167 = vpop.f32.mrf.mxu0
    %v1168 = vadd.f32 %v333, %v1167
    %v1169 = vpop.f32.mrf.mxu0
    %v1170 = vadd.f32 %v337, %v1169
    %v1171 = vpop.f32.mrf.mxu0
    %v1172 = vpop.f32.mrf.mxu0
    %1173 = vdwg.mxu0
    %1174 = vmatprep.subr.bf16.mxu0 %v905
    %1175 = vmatpush1.bf16.msra.mxu0 %v904
    %1176 = vmatprep.subr.bf16.mxu0 %v902
    %1177 = vmatpush1.bf16.msra.mxu0 %v901
    %1178 = vmatprep.subr.bf16.mxu0 %v899
    %1179 = vmatpush1.bf16.msra.mxu0 %v898
    %1180 = vmatprep.subr.bf16.mxu0 %v896
    %1181 = vmatpush1.bf16.msra.mxu0 %v895
    %1182 = vmatprep.subr.bf16.mxu0 %v893
    %1183 = vmatpush1.bf16.msra.mxu0 %v892
    %1184 = vmatprep.subr.bf16.mxu0 %v890
    %1185 = vmatpush1.bf16.msra.mxu0 %v889
    %1186 = vmatprep.subr.bf16.mxu0 %v887
    %1187 = vmatpush1.bf16.msra.mxu0 %v886
    %1188 = vmatprep.subr.bf16.mxu0 %v884
    %1189 = vmatpush1.bf16.msra.mxu0 %v883
    %1190 = vmatprep.subr.bf16.mxu0 %v929
    %1191 = vmatpush2.bf16.msra.mxu0 %v928
    %1192 = vmatprep.subr.bf16.mxu0 %v926
    %1193 = vmatpush2.bf16.msra.mxu0 %v925
    %1194 = vmatprep.subr.bf16.mxu0 %v923
    %1195 = vmatpush2.bf16.msra.mxu0 %v922
    %1196 = vmatprep.subr.bf16.mxu0 %v920
    %1197 = vmatpush2.bf16.msra.mxu0 %v919
    %1198 = vmatprep.subr.bf16.mxu0 %v917
    %1199 = vmatpush2.bf16.msra.mxu0 %v916
    %1200 = vmatprep.subr.bf16.mxu0 %v914
    %1201 = vmatpush2.bf16.msra.mxu0 %v913
    %1202 = vmatprep.subr.bf16.mxu0 %v911
    %1203 = vmatpush2.bf16.msra.mxu0 %v910
    %1204 = vmatprep.subr.bf16.mxu0 %v908
    %1205 = vmatpush2.bf16.msra.mxu0 %v907
    %1206 = vmatprep.mubr.bf16.mxu0 %v128
    %1207 = vmatmul.mubr.bf16.gmra.mxu0 %v127
    %v1208 = vpop.f32.mrf.mxu0
    %v1209 = vadd.f32 %v1168, %v1208
    %v1210 = vpop.f32.mrf.mxu0
    %v1211 = vadd.f32 %v1170, %v1210
    %v1212 = vpop.f32.mrf.mxu0
    %v1213 = vpop.f32.mrf.mxu0
    %1214 = vdwg.mxu0
    %1215 = vmatprep.subr.bf16.mxu0 %v953
    %1216 = vmatpush1.bf16.msra.mxu0 %v952
    %1217 = vmatprep.subr.bf16.mxu0 %v950
    %1218 = vmatpush1.bf16.msra.mxu0 %v949
    %1219 = vmatprep.subr.bf16.mxu0 %v947
    %1220 = vmatpush1.bf16.msra.mxu0 %v946
    %1221 = vmatprep.subr.bf16.mxu0 %v944
    %1222 = vmatpush1.bf16.msra.mxu0 %v943
    %1223 = vmatprep.subr.bf16.mxu0 %v941
    %1224 = vmatpush1.bf16.msra.mxu0 %v940
    %1225 = vmatprep.subr.bf16.mxu0 %v938
    %1226 = vmatpush1.bf16.msra.mxu0 %v937
    %1227 = vmatprep.subr.bf16.mxu0 %v935
    %1228 = vmatpush1.bf16.msra.mxu0 %v934
    %1229 = vmatprep.subr.bf16.mxu0 %v932
    %1230 = vmatpush1.bf16.msra.mxu0 %v931
    %1231 = vmatprep.subr.bf16.mxu0 %v977
    %1232 = vmatpush2.bf16.msra.mxu0 %v976
    %1233 = vmatprep.subr.bf16.mxu0 %v974
    %1234 = vmatpush2.bf16.msra.mxu0 %v973
    %1235 = vmatprep.subr.bf16.mxu0 %v971
    %1236 = vmatpush2.bf16.msra.mxu0 %v970
    %1237 = vmatprep.subr.bf16.mxu0 %v968
    %1238 = vmatpush2.bf16.msra.mxu0 %v967
    %1239 = vmatprep.subr.bf16.mxu0 %v965
    %1240 = vmatpush2.bf16.msra.mxu0 %v964
    %1241 = vmatprep.subr.bf16.mxu0 %v962
    %1242 = vmatpush2.bf16.msra.mxu0 %v961
    %1243 = vmatprep.subr.bf16.mxu0 %v959
    %1244 = vmatpush2.bf16.msra.mxu0 %v958
    %1245 = vmatprep.subr.bf16.mxu0 %v956
    %1246 = vmatpush2.bf16.msra.mxu0 %v955
    %1247 = vmatprep.mubr.bf16.mxu0 %v130
    %1248 = vmatmul.mubr.bf16.gmra.mxu0 %v129
    %v1249 = vpop.f32.mrf.mxu0
    %v1250 = vadd.f32 %v1209, %v1249
    %v1251 = vpop.f32.mrf.mxu0
    %v1252 = vadd.f32 %v1211, %v1251
    %v1253 = vpop.f32.mrf.mxu0
    %v1254 = vpop.f32.mrf.mxu0
    %1255 = vdwg.mxu0
    %1256 = vmatprep.subr.bf16.mxu0 0
    %1257 = vmatpush1.bf16.msra.mxu0 0
    %1258 = vmatprep.subr.bf16.mxu0 0
    %1259 = vmatpush1.bf16.msra.mxu0 0
    %1260 = vmatprep.subr.bf16.mxu0 0
    %1261 = vmatpush1.bf16.msra.mxu0 0
    %1262 = vmatprep.subr.bf16.mxu0 0
    %1263 = vmatpush1.bf16.msra.mxu0 0
    %1264 = vmatprep.subr.bf16.mxu0 0
    %1265 = vmatpush1.bf16.msra.mxu0 0
    %1266 = vmatprep.subr.bf16.mxu0 0
    %1267 = vmatpush1.bf16.msra.mxu0 0
    %1268 = vmatprep.subr.bf16.mxu0 0
    %1269 = vmatpush1.bf16.msra.mxu0 0
    %1270 = vmatprep.subr.bf16.mxu0 %v980
    %1271 = vmatpush1.bf16.msra.mxu0 %v979
    %1272 = vmatprep.subr.bf16.mxu0 0
    %1273 = vmatpush2.bf16.msra.mxu0 0
    %1274 = vmatprep.subr.bf16.mxu0 0
    %1275 = vmatpush2.bf16.msra.mxu0 0
    %1276 = vmatprep.subr.bf16.mxu0 0
    %1277 = vmatpush2.bf16.msra.mxu0 0
    %1278 = vmatprep.subr.bf16.mxu0 0
    %1279 = vmatpush2.bf16.msra.mxu0 0
    %1280 = vmatprep.subr.bf16.mxu0 0
    %1281 = vmatpush2.bf16.msra.mxu0 0
    %1282 = vmatprep.subr.bf16.mxu0 0
    %1283 = vmatpush2.bf16.msra.mxu0 0
    %1284 = vmatprep.subr.bf16.mxu0 0
    %1285 = vmatpush2.bf16.msra.mxu0 0
    %1286 = vmatprep.subr.bf16.mxu0 0
    %1287 = vmatpush2.bf16.msra.mxu0 0
    %1288 = vmatprep.mubr.bf16.mxu0 0
    %1289 = vmatmul.mubr.bf16.gmra.mxu0 %v1131
    %v1290 = vpop.f32.mrf.mxu0
    %v1291 = vadd.f32 %v1250, %v1290
    %v1292 = vpop.f32.mrf.mxu0
    %v1293 = vadd.f32 %v1252, %v1292
    %v1294 = vpop.f32.mrf.mxu0
    %v1295 = vpop.f32.mrf.mxu0
    %1296 = vdwg.mxu0
    %1297 = vmatprep.subr.bf16.mxu0 0
    %1298 = vmatpush1.bf16.msra.mxu0 %v858
    %1299 = vmatprep.subr.bf16.mxu0 0
    %1300 = vmatpush1.bf16.msra.mxu0 %v855
    %1301 = vmatprep.subr.bf16.mxu0 0
    %1302 = vmatpush1.bf16.msra.mxu0 %v852
    %1303 = vmatprep.subr.bf16.mxu0 0
    %1304 = vmatpush1.bf16.msra.mxu0 %v849
    %1305 = vmatprep.subr.bf16.mxu0 0
    %1306 = vmatpush1.bf16.msra.mxu0 %v846
    %1307 = vmatprep.subr.bf16.mxu0 0
    %1308 = vmatpush1.bf16.msra.mxu0 %v843
    %1309 = vmatprep.subr.bf16.mxu0 0
    %1310 = vmatpush1.bf16.msra.mxu0 %v840
    %1311 = vmatprep.subr.bf16.mxu0 0
    %1312 = vmatpush1.bf16.msra.mxu0 %v837
    %1313 = vmatprep.subr.bf16.mxu0 0
    %1314 = vmatpush2.bf16.msra.mxu0 %v882
    %1315 = vmatprep.subr.bf16.mxu0 0
    %1316 = vmatpush2.bf16.msra.mxu0 %v879
    %1317 = vmatprep.subr.bf16.mxu0 0
    %1318 = vmatpush2.bf16.msra.mxu0 %v876
    %1319 = vmatprep.subr.bf16.mxu0 0
    %1320 = vmatpush2.bf16.msra.mxu0 %v873
    %1321 = vmatprep.subr.bf16.mxu0 0
    %1322 = vmatpush2.bf16.msra.mxu0 %v870
    %1323 = vmatprep.subr.bf16.mxu0 0
    %1324 = vmatpush2.bf16.msra.mxu0 %v867
    %1325 = vmatprep.subr.bf16.mxu0 0
    %1326 = vmatpush2.bf16.msra.mxu0 %v864
    %1327 = vmatprep.subr.bf16.mxu0 0
    %1328 = vmatpush2.bf16.msra.mxu0 %v861
    %1329 = vmatprep.mubr.bf16.mxu0 %v126
    %1330 = vmatmul.mubr.bf16.gmra.mxu0 %v125
    %v1331 = vpop.f32.mrf.mxu0
    %v1332 = vadd.f32 %v341, %v1331
    %v1333 = vpop.f32.mrf.mxu0
    %v1334 = vpop.f32.mrf.mxu0
    %v1335 = vpop.f32.mrf.mxu0
    %1336 = vdwg.mxu0
    %1337 = vmatprep.subr.bf16.mxu0 0
    %1338 = vmatpush1.bf16.msra.mxu0 %v906
    %1339 = vmatprep.subr.bf16.mxu0 0
    %1340 = vmatpush1.bf16.msra.mxu0 %v903
    %1341 = vmatprep.subr.bf16.mxu0 0
    %1342 = vmatpush1.bf16.msra.mxu0 %v900
    %1343 = vmatprep.subr.bf16.mxu0 0
    %1344 = vmatpush1.bf16.msra.mxu0 %v897
    %1345 = vmatprep.subr.bf16.mxu0 0
    %1346 = vmatpush1.bf16.msra.mxu0 %v894
    %1347 = vmatprep.subr.bf16.mxu0 0
    %1348 = vmatpush1.bf16.msra.mxu0 %v891
    %1349 = vmatprep.subr.bf16.mxu0 0
    %1350 = vmatpush1.bf16.msra.mxu0 %v888
    %1351 = vmatprep.subr.bf16.mxu0 0
    %1352 = vmatpush1.bf16.msra.mxu0 %v885
    %1353 = vmatprep.subr.bf16.mxu0 0
    %1354 = vmatpush2.bf16.msra.mxu0 %v930
    %1355 = vmatprep.subr.bf16.mxu0 0
    %1356 = vmatpush2.bf16.msra.mxu0 %v927
    %1357 = vmatprep.subr.bf16.mxu0 0
    %1358 = vmatpush2.bf16.msra.mxu0 %v924
    %1359 = vmatprep.subr.bf16.mxu0 0
    %1360 = vmatpush2.bf16.msra.mxu0 %v921
    %1361 = vmatprep.subr.bf16.mxu0 0
    %1362 = vmatpush2.bf16.msra.mxu0 %v918
    %1363 = vmatprep.subr.bf16.mxu0 0
    %1364 = vmatpush2.bf16.msra.mxu0 %v915
    %1365 = vmatprep.subr.bf16.mxu0 0
    %1366 = vmatpush2.bf16.msra.mxu0 %v912
    %1367 = vmatprep.subr.bf16.mxu0 0
    %1368 = vmatpush2.bf16.msra.mxu0 %v909
    %1369 = vmatprep.mubr.bf16.mxu0 %v128
    %1370 = vmatmul.mubr.bf16.gmra.mxu0 %v127
    %v1371 = vpop.f32.mrf.mxu0
    %v1372 = vadd.f32 %v1332, %v1371
    %v1373 = vpop.f32.mrf.mxu0
    %v1374 = vpop.f32.mrf.mxu0
    %v1375 = vpop.f32.mrf.mxu0
    %1376 = vdwg.mxu0
    %1377 = vmatprep.subr.bf16.mxu0 0
    %1378 = vmatpush1.bf16.msra.mxu0 %v954
    %1379 = vmatprep.subr.bf16.mxu0 0
    %1380 = vmatpush1.bf16.msra.mxu0 %v951
    %1381 = vmatprep.subr.bf16.mxu0 0
    %1382 = vmatpush1.bf16.msra.mxu0 %v948
    %1383 = vmatprep.subr.bf16.mxu0 0
    %1384 = vmatpush1.bf16.msra.mxu0 %v945
    %1385 = vmatprep.subr.bf16.mxu0 0
    %1386 = vmatpush1.bf16.msra.mxu0 %v942
    %1387 = vmatprep.subr.bf16.mxu0 0
    %1388 = vmatpush1.bf16.msra.mxu0 %v939
    %1389 = vmatprep.subr.bf16.mxu0 0
    %1390 = vmatpush1.bf16.msra.mxu0 %v936
    %1391 = vmatprep.subr.bf16.mxu0 0
    %1392 = vmatpush1.bf16.msra.mxu0 %v933
    %1393 = vmatprep.subr.bf16.mxu0 0
    %1394 = vmatpush2.bf16.msra.mxu0 %v978
    %1395 = vmatprep.subr.bf16.mxu0 0
    %1396 = vmatpush2.bf16.msra.mxu0 %v975
    %1397 = vmatprep.subr.bf16.mxu0 0
    %1398 = vmatpush2.bf16.msra.mxu0 %v972
    %1399 = vmatprep.subr.bf16.mxu0 0
    %1400 = vmatpush2.bf16.msra.mxu0 %v969
    %1401 = vmatprep.subr.bf16.mxu0 0
    %1402 = vmatpush2.bf16.msra.mxu0 %v966
    %1403 = vmatprep.subr.bf16.mxu0 0
    %1404 = vmatpush2.bf16.msra.mxu0 %v963
    %1405 = vmatprep.subr.bf16.mxu0 0
    %1406 = vmatpush2.bf16.msra.mxu0 %v960
    %1407 = vmatprep.subr.bf16.mxu0 0
    %1408 = vmatpush2.bf16.msra.mxu0 %v957
    %1409 = vmatprep.mubr.bf16.mxu0 %v130
    %1410 = vmatmul.mubr.bf16.gmra.mxu0 %v129
    %v1411 = vpop.f32.mrf.mxu0
    %v1412 = vadd.f32 %v1372, %v1411
    %v1413 = vpop.f32.mrf.mxu0
    %v1414 = vpop.f32.mrf.mxu0
    %v1415 = vpop.f32.mrf.mxu0
    %1416 = vdwg.mxu0
    %1417 = vmatprep.subr.bf16.mxu0 0
    %1418 = vmatpush1.bf16.msra.mxu0 0
    %1419 = vmatprep.subr.bf16.mxu0 0
    %1420 = vmatpush1.bf16.msra.mxu0 0
    %1421 = vmatprep.subr.bf16.mxu0 0
    %1422 = vmatpush1.bf16.msra.mxu0 0
    %1423 = vmatprep.subr.bf16.mxu0 0
    %1424 = vmatpush1.bf16.msra.mxu0 0
    %1425 = vmatprep.subr.bf16.mxu0 0
    %1426 = vmatpush1.bf16.msra.mxu0 0
    %1427 = vmatprep.subr.bf16.mxu0 0
    %1428 = vmatpush1.bf16.msra.mxu0 0
    %1429 = vmatprep.subr.bf16.mxu0 0
    %1430 = vmatpush1.bf16.msra.mxu0 0
    %1431 = vmatprep.subr.bf16.mxu0 0
    %1432 = vmatpush1.bf16.msra.mxu0 %v981
    %1433 = vmatprep.subr.bf16.mxu0 0
    %1434 = vmatpush2.bf16.msra.mxu0 0
    %1435 = vmatprep.subr.bf16.mxu0 0
    %1436 = vmatpush2.bf16.msra.mxu0 0
    %1437 = vmatprep.subr.bf16.mxu0 0
    %1438 = vmatpush2.bf16.msra.mxu0 0
    %1439 = vmatprep.subr.bf16.mxu0 0
    %1440 = vmatpush2.bf16.msra.mxu0 0
    %1441 = vmatprep.subr.bf16.mxu0 0
    %1442 = vmatpush2.bf16.msra.mxu0 0
    %1443 = vmatprep.subr.bf16.mxu0 0
    %1444 = vmatpush2.bf16.msra.mxu0 0
    %1445 = vmatprep.subr.bf16.mxu0 0
    %1446 = vmatpush2.bf16.msra.mxu0 0
    %1447 = vmatprep.subr.bf16.mxu0 0
    %1448 = vmatpush2.bf16.msra.mxu0 0
    %1449 = vmatprep.mubr.bf16.mxu0 0
    %1450 = vmatmul.mubr.bf16.gmra.mxu0 %v1131
    %v1451 = vpop.f32.mrf.mxu0
    %v1452 = vadd.f32 %v1412, %v1451
    %v1453 = vpop.f32.mrf.mxu0
    %v1454 = vpop.f32.mrf.mxu0
    %v1455 = vpop.f32.mrf.mxu0
    %1456 = vdwg.mxu0
    %v1457 = vmax.f32 %v1291, 0.0
    %v1458 = vmax.f32 %v1293, 0.0
    %v1459 = vmax.f32 %v1452, 0.0
    %v1460 = vpack.c.bf16 %v1457, %v1457
    %v1461 = vpack.c.bf16 %v1458, %v1458
    %v1462 = vpack.c.bf16 %v1459, %v1459
    %v1463 = vld [vmem:[#allocation7] sm:$0xf]
    %v1464 = vld [vmem:[#allocation7 + $0x4] sm:$0xf]
    %v1465 = vld [vmem:[#allocation7 + $0x8] sm:$0xf]
    %v1466 = vld [vmem:[#allocation7 + $0xc] sm:$0xf]
    %v1467 = vld [vmem:[#allocation7 + $0x10] sm:$0xf]
    %v1468 = vld [vmem:[#allocation7 + $0x14] sm:$0xf]
    %v1469 = vld [vmem:[#allocation7 + $0x18] sm:$0xf]
    %v1470 = vld [vmem:[#allocation7 + $0x1c] sm:$0xf]
    %v1471 = vld [vmem:[#allocation7 + $0x20] sm:$0xf]
    %v1472 = vld [vmem:[#allocation7 + $0x24] sm:$0xf]
    %v1473 = vld [vmem:[#allocation7 + $0x28] sm:$0xf]
    %v1474 = vld [vmem:[#allocation7 + $0x2c] sm:$0xf]
    %v1475 = vld [vmem:[#allocation7 + $0x30] sm:$0xf]
    %v1476 = vld [vmem:[#allocation7 + $0x34] sm:$0xf]
    %v1477 = vld [vmem:[#allocation7 + $0x38] sm:$0xf]
    %v1478 = vld [vmem:[#allocation7 + $0x3c] sm:$0xf]
    %v1479 = vld [vmem:[#allocation7 + $0x40] sm:$0xf]
    %v1480 = vld [vmem:[#allocation7 + $0x44] sm:$0xf]
    %v1481 = vld [vmem:[#allocation7 + $0x48] sm:$0xf]
    %v1482 = vld [vmem:[#allocation7 + $0x4c] sm:$0xf]
    %v1483 = vld [vmem:[#allocation7 + $0x50] sm:$0xf]
    %v1484 = vld [vmem:[#allocation7 + $0x54] sm:$0xf]
    %v1485 = vld [vmem:[#allocation7 + $0x58] sm:$0xf]
    %v1486 = vld [vmem:[#allocation7 + $0x5c] sm:$0xf]
    %v1487 = vld [vmem:[#allocation7 + $0x60] sm:$0xf]
    %v1488 = vld [vmem:[#allocation7 + $0x64] sm:$0xf]
    %v1489 = vld [vmem:[#allocation7 + $0x68] sm:$0xf]
    %v1490 = vld [vmem:[#allocation7 + $0x6c] sm:$0xf]
    %v1491 = vld [vmem:[#allocation7 + $0x70] sm:$0xf]
    %v1492 = vld [vmem:[#allocation7 + $0x74] sm:$0xf]
    %v1493 = vld [vmem:[#allocation7 + $0x78] sm:$0xf]
    %v1494 = vld [vmem:[#allocation7 + $0x7c] sm:$0xf]
    %v1495 = vld [vmem:[#allocation7 + $0x80] sm:$0xf]
    %v1496 = vld [vmem:[#allocation7 + $0x84] sm:$0xf]
    %v1497 = vld [vmem:[#allocation7 + $0x88] sm:$0xf]
    %v1498 = vld [vmem:[#allocation7 + $0x8c] sm:$0xf]
    %v1499 = vld [vmem:[#allocation7 + $0x90] sm:$0xf]
    %v1500 = vld [vmem:[#allocation7 + $0x94] sm:$0xf]
    %v1501 = vld [vmem:[#allocation7 + $0x98] sm:$0xf]
    %v1502 = vld [vmem:[#allocation7 + $0x9c] sm:$0xf]
    %v1503 = vld [vmem:[#allocation7 + $0xa0] sm:$0xf]
    %v1504 = vld [vmem:[#allocation7 + $0xa4] sm:$0xf]
    %v1505 = vld [vmem:[#allocation7 + $0xa8] sm:$0xf]
    %v1506 = vld [vmem:[#allocation7 + $0xac] sm:$0xf]
    %v1507 = vld [vmem:[#allocation7 + $0xb0] sm:$0xf]
    %v1508 = vld [vmem:[#allocation7 + $0xb4] sm:$0xf]
    %v1509 = vld [vmem:[#allocation7 + $0xb8] sm:$0xf]
    %v1510 = vld [vmem:[#allocation7 + $0xbc] sm:$0xf]
    %v1511 = vld [vmem:[%s4] sm:$0x1]
    %v1513 = vlaneseq
    %v1514 = vshrl.u32 %v1513, 7
    %v1515 = vsub.s32 0, %v1514
    %v1516 = vrot.slane %v1511, %v1515
    %v1566 = vunpack.c.l.b16 %v1463
    %v1567 = vunpack.c.l.b16 %v1464
    %v1568 = vunpack.c.l.b16 %v1465
    %v1569 = vunpack.c.l.b16 %v1466
    %v1570 = vunpack.c.l.b16 %v1467
    %v1571 = vunpack.c.l.b16 %v1468
    %v1572 = vunpack.c.l.b16 %v1469
    %v1573 = vunpack.c.l.b16 %v1470
    %v1574 = vunpack.c.l.b16 %v1471
    %v1575 = vunpack.c.l.b16 %v1472
    %v1576 = vunpack.c.l.b16 %v1473
    %v1577 = vunpack.c.l.b16 %v1474
    %v1578 = vunpack.c.l.b16 %v1475
    %v1579 = vunpack.c.l.b16 %v1476
    %v1580 = vunpack.c.l.b16 %v1477
    %v1581 = vunpack.c.l.b16 %v1478
    %v1582 = vunpack.c.l.b16 %v1479
    %v1583 = vunpack.c.l.b16 %v1480
    %v1584 = vunpack.c.l.b16 %v1481
    %v1585 = vunpack.c.l.b16 %v1482
    %v1586 = vunpack.c.l.b16 %v1483
    %v1587 = vunpack.c.l.b16 %v1484
    %v1588 = vunpack.c.l.b16 %v1485
    %v1589 = vunpack.c.l.b16 %v1486
    %v1590 = vunpack.c.l.b16 %v1487
    %v1591 = vunpack.c.l.b16 %v1488
    %v1592 = vunpack.c.l.b16 %v1489
    %v1593 = vunpack.c.l.b16 %v1490
    %v1594 = vunpack.c.l.b16 %v1491
    %v1595 = vunpack.c.l.b16 %v1492
    %v1596 = vunpack.c.l.b16 %v1493
    %v1597 = vunpack.c.l.b16 %v1494
    %v1598 = vunpack.c.l.b16 %v1495
    %v1599 = vunpack.c.l.b16 %v1496
    %v1600 = vunpack.c.l.b16 %v1497
    %v1601 = vunpack.c.l.b16 %v1498
    %v1602 = vunpack.c.l.b16 %v1499
    %v1603 = vunpack.c.l.b16 %v1500
    %v1604 = vunpack.c.l.b16 %v1501
    %v1605 = vunpack.c.l.b16 %v1502
    %v1606 = vunpack.c.l.b16 %v1503
    %v1607 = vunpack.c.l.b16 %v1504
    %v1608 = vunpack.c.l.b16 %v1505
    %v1609 = vunpack.c.l.b16 %v1506
    %v1610 = vunpack.c.l.b16 %v1507
    %v1611 = vunpack.c.l.b16 %v1508
    %v1612 = vunpack.c.l.b16 %v1509
    %v1613 = vunpack.c.l.b16 %v1510
    %v1614 = vpack.c.b16 %v1567, %v1566
    %v1615 = vpack.c.b16 %v1569, %v1568
    %v1616 = vpack.c.b16 %v1571, %v1570
    %v1617 = vpack.c.b16 %v1573, %v1572
    %v1618 = vpack.c.b16 %v1575, %v1574
    %v1619 = vpack.c.b16 %v1577, %v1576
    %v1620 = vpack.c.b16 %v1579, %v1578
    %v1621 = vpack.c.b16 %v1581, %v1580
    %v1622 = vpack.c.b16 %v1583, %v1582
    %v1623 = vpack.c.b16 %v1585, %v1584
    %v1624 = vpack.c.b16 %v1587, %v1586
    %v1625 = vpack.c.b16 %v1589, %v1588
    %v1626 = vpack.c.b16 %v1591, %v1590
    %v1627 = vpack.c.b16 %v1593, %v1592
    %v1628 = vpack.c.b16 %v1595, %v1594
    %v1629 = vpack.c.b16 %v1597, %v1596
    %v1630 = vpack.c.b16 %v1599, %v1598
    %v1631 = vpack.c.b16 %v1601, %v1600
    %v1632 = vpack.c.b16 %v1603, %v1602
    %v1633 = vpack.c.b16 %v1605, %v1604
    %v1634 = vpack.c.b16 %v1607, %v1606
    %v1635 = vpack.c.b16 %v1609, %v1608
    %v1636 = vpack.c.b16 %v1611, %v1610
    %v1637 = vpack.c.b16 %v1613, %v1612
    %1662 = vmatprep.subr.bf16.mxu0 0
    %1663 = vmatpush1.bf16.msra.mxu0 %v1621
    %1664 = vmatprep.subr.bf16.mxu0 0
    %1665 = vmatpush1.bf16.msra.mxu0 %v1620
    %1666 = vmatprep.subr.bf16.mxu0 0
    %1667 = vmatpush1.bf16.msra.mxu0 %v1619
    %1668 = vmatprep.subr.bf16.mxu0 0
    %1669 = vmatpush1.bf16.msra.mxu0 %v1618
    %1670 = vmatprep.subr.bf16.mxu0 0
    %1671 = vmatpush1.bf16.msra.mxu0 %v1617
    %1672 = vmatprep.subr.bf16.mxu0 0
    %1673 = vmatpush1.bf16.msra.mxu0 %v1616
    %1674 = vmatprep.subr.bf16.mxu0 0
    %1675 = vmatpush1.bf16.msra.mxu0 %v1615
    %1676 = vmatprep.subr.bf16.mxu0 0
    %1677 = vmatpush1.bf16.msra.mxu0 %v1614
    %1678 = vmatprep.subr.bf16.mxu0 0
    %1679 = vmatpush2.bf16.msra.mxu0 %v1629
    %1680 = vmatprep.subr.bf16.mxu0 0
    %1681 = vmatpush2.bf16.msra.mxu0 %v1628
    %1682 = vmatprep.subr.bf16.mxu0 0
    %1683 = vmatpush2.bf16.msra.mxu0 %v1627
    %1684 = vmatprep.subr.bf16.mxu0 0
    %1685 = vmatpush2.bf16.msra.mxu0 %v1626
    %1686 = vmatprep.subr.bf16.mxu0 0
    %1687 = vmatpush2.bf16.msra.mxu0 %v1625
    %1688 = vmatprep.subr.bf16.mxu0 0
    %1689 = vmatpush2.bf16.msra.mxu0 %v1624
    %1690 = vmatprep.subr.bf16.mxu0 0
    %1691 = vmatpush2.bf16.msra.mxu0 %v1623
    %1692 = vmatprep.subr.bf16.mxu0 0
    %1693 = vmatpush2.bf16.msra.mxu0 %v1622
    %1694 = vmatprep.mubr.bf16.mxu0 %v1461
    %1695 = vmatmul.mubr.bf16.gmra.mxu0 %v1460
    %v1696 = vpop.f32.mrf.mxu0
    %v1697 = vadd.f32 %v1516, %v1696
    %v1698 = vpop.f32.mrf.mxu0
    %v1699 = vpop.f32.mrf.mxu0
    %v1700 = vpop.f32.mrf.mxu0
    %1701 = vdwg.mxu0
    %1702 = vmatprep.subr.bf16.mxu0 0
    %1703 = vmatpush1.bf16.msra.mxu0 %v1637
    %1704 = vmatprep.subr.bf16.mxu0 0
    %1705 = vmatpush1.bf16.msra.mxu0 %v1636
    %1706 = vmatprep.subr.bf16.mxu0 0
    %1707 = vmatpush1.bf16.msra.mxu0 %v1635
    %1708 = vmatprep.subr.bf16.mxu0 0
    %1709 = vmatpush1.bf16.msra.mxu0 %v1634
    %1710 = vmatprep.subr.bf16.mxu0 0
    %1711 = vmatpush1.bf16.msra.mxu0 %v1633
    %1712 = vmatprep.subr.bf16.mxu0 0
    %1713 = vmatpush1.bf16.msra.mxu0 %v1632
    %1714 = vmatprep.subr.bf16.mxu0 0
    %1715 = vmatpush1.bf16.msra.mxu0 %v1631
    %1716 = vmatprep.subr.bf16.mxu0 0
    %1717 = vmatpush1.bf16.msra.mxu0 %v1630
    %1718 = vmatprep.subr.bf16.mxu0 0
    %1719 = vmatpush2.bf16.msra.mxu0 0
    %1720 = vmatprep.subr.bf16.mxu0 0
    %1721 = vmatpush2.bf16.msra.mxu0 0
    %1722 = vmatprep.subr.bf16.mxu0 0
    %1723 = vmatpush2.bf16.msra.mxu0 0
    %1724 = vmatprep.subr.bf16.mxu0 0
    %1725 = vmatpush2.bf16.msra.mxu0 0
    %1726 = vmatprep.subr.bf16.mxu0 0
    %1727 = vmatpush2.bf16.msra.mxu0 0
    %1728 = vmatprep.subr.bf16.mxu0 0
    %1729 = vmatpush2.bf16.msra.mxu0 0
    %1730 = vmatprep.subr.bf16.mxu0 0
    %1731 = vmatpush2.bf16.msra.mxu0 0
    %1732 = vmatprep.subr.bf16.mxu0 0
    %1733 = vmatpush2.bf16.msra.mxu0 0
    %1734 = vmatprep.mubr.bf16.mxu0 0
    %1735 = vmatmul.mubr.bf16.gmra.mxu0 %v1462
    %v1736 = vpop.f32.mrf.mxu0
    %v1737 = vadd.f32 %v1697, %v1736
    %v1738 = vpop.f32.mrf.mxu0
    %v1739 = vpop.f32.mrf.mxu0
    %v1740 = vpop.f32.mrf.mxu0
    %1741 = vdwg.mxu0
    %v1742 = vmax.f32 %v1737, 0.0
    %v1743 = vpack.c.bf16 %v1742, %v1742
    %v1744 = vld [vmem:[#allocation8] sm:$0xf]
    %v1745 = vld [vmem:[#allocation8 + $0x4] sm:$0xf]
    %v1746 = vld [vmem:[#allocation8 + $0x8] sm:$0xf]
    %v1747 = vld [vmem:[#allocation8 + $0xc] sm:$0xf]
    %v1748 = vld [vmem:[#allocation8 + $0x10] sm:$0xf]
    %v1749 = vld [vmem:[#allocation8 + $0x14] sm:$0xf]
    %v1750 = vld [vmem:[#allocation8 + $0x18] sm:$0xf]
    %v1751 = vld [vmem:[#allocation8 + $0x1c] sm:$0xf]
    %v1752 = vld [vmem:[#allocation8 + $0x20] sm:$0xf]
    %v1753 = vld [vmem:[#allocation8 + $0x24] sm:$0xf]
    %v1754 = vld [vmem:[#allocation8 + $0x28] sm:$0xf]
    %v1755 = vld [vmem:[#allocation8 + $0x2c] sm:$0xf]
    %v1756 = vld [vmem:[#allocation8 + $0x30] sm:$0xf]
    %v1757 = vld [vmem:[#allocation8 + $0x34] sm:$0xf]
    %v1758 = vld [vmem:[#allocation8 + $0x38] sm:$0xf]
    %v1759 = vld [vmem:[#allocation8 + $0x3c] sm:$0xf]
    %v1760 = vld [vmem:[%s6] sm:$0x1]
    %v1762 = vlaneseq
    %v1763 = vshrl.u32 %v1762, 7
    %v1764 = vsub.s32 0, %v1763
    %v1765 = vrot.slane %v1760, %v1764
    %v1783 = vunpack.c.l.b16 %v1744
    %v1784 = vunpack.c.l.b16 %v1745
    %v1785 = vunpack.c.l.b16 %v1746
    %v1786 = vunpack.c.l.b16 %v1747
    %v1787 = vunpack.c.l.b16 %v1748
    %v1788 = vunpack.c.l.b16 %v1749
    %v1789 = vunpack.c.l.b16 %v1750
    %v1790 = vunpack.c.l.b16 %v1751
    %v1791 = vunpack.c.l.b16 %v1752
    %v1792 = vunpack.c.l.b16 %v1753
    %v1793 = vunpack.c.l.b16 %v1754
    %v1794 = vunpack.c.l.b16 %v1755
    %v1795 = vunpack.c.l.b16 %v1756
    %v1796 = vunpack.c.l.b16 %v1757
    %v1797 = vunpack.c.l.b16 %v1758
    %v1798 = vunpack.c.l.b16 %v1759
    %v1799 = vpack.c.b16 %v1784, %v1783
    %v1800 = vpack.c.b16 %v1786, %v1785
    %v1801 = vpack.c.b16 %v1788, %v1787
    %v1802 = vpack.c.b16 %v1790, %v1789
    %v1803 = vpack.c.b16 %v1792, %v1791
    %v1804 = vpack.c.b16 %v1794, %v1793
    %v1805 = vpack.c.b16 %v1796, %v1795
    %v1806 = vpack.c.b16 %v1798, %v1797
    %1815 = vmatprep.subr.bf16.mxu0 0
    %1816 = vmatpush1.bf16.msra.mxu0 %v1806
    %1817 = vmatprep.subr.bf16.mxu0 0
    %1818 = vmatpush1.bf16.msra.mxu0 %v1805
    %1819 = vmatprep.subr.bf16.mxu0 0
    %1820 = vmatpush1.bf16.msra.mxu0 %v1804
    %1821 = vmatprep.subr.bf16.mxu0 0
    %1822 = vmatpush1.bf16.msra.mxu0 %v1803
    %1823 = vmatprep.subr.bf16.mxu0 0
    %1824 = vmatpush1.bf16.msra.mxu0 %v1802
    %1825 = vmatprep.subr.bf16.mxu0 0
    %1826 = vmatpush1.bf16.msra.mxu0 %v1801
    %1827 = vmatprep.subr.bf16.mxu0 0
    %1828 = vmatpush1.bf16.msra.mxu0 %v1800
    %1829 = vmatprep.subr.bf16.mxu0 0
    %1830 = vmatpush1.bf16.msra.mxu0 %v1799
    %1831 = vmatprep.subr.bf16.mxu0 0
    %1832 = vmatpush2.bf16.msra.mxu0 0
    %1833 = vmatprep.subr.bf16.mxu0 0
    %1834 = vmatpush2.bf16.msra.mxu0 0
    %1835 = vmatprep.subr.bf16.mxu0 0
    %1836 = vmatpush2.bf16.msra.mxu0 0
    %1837 = vmatprep.subr.bf16.mxu0 0
    %1838 = vmatpush2.bf16.msra.mxu0 0
    %1839 = vmatprep.subr.bf16.mxu0 0
    %1840 = vmatpush2.bf16.msra.mxu0 0
    %1841 = vmatprep.subr.bf16.mxu0 0
    %1842 = vmatpush2.bf16.msra.mxu0 0
    %1843 = vmatprep.subr.bf16.mxu0 0
    %1844 = vmatpush2.bf16.msra.mxu0 0
    %1845 = vmatprep.subr.bf16.mxu0 0
    %1846 = vmatpush2.bf16.msra.mxu0 0
    %1847 = vmatprep.mubr.bf16.mxu0 0
    %1848 = vmatmul.mubr.bf16.gmra.mxu0 %v1743
    %v1849 = vpop.f32.mrf.mxu0
    %v1850 = vadd.f32 %v1765, %v1849
    %v1851 = vpop.f32.mrf.mxu0
    %v1852 = vpop.f32.mrf.mxu0
    %v1853 = vpop.f32.mrf.mxu0
    %1854 = vdwg.mxu0
    %v1855 = vpack.c.bf16 %v1850, %v1850
    %1856 = vst [vmem:[#allocation10] sm:$0x1] %v1855
    // Predicated region
    $region46: #{tpu_custom_call.1} parent=1 // pred_check
      _
    $region47: #{tpu_custom_call.1} parent=1 // pred_check_branch
      %1858 = sbr.rel (0) target = $region49
    $region48: #{tpu_custom_call.1} parent=1 // pred_region
      %s1860 = ssub.s32 16, 16
      %1861 = vsyncadd [#allocation4], %s1860
      %s1863 = sshll.u32 [#allocation10], 4
      %s1864 = int_to_ptr.vmem [resolvable:$true] %s1863
      %1866 = dma.vmem_to_hbm [thread:$0]  %s1864, 16, %s7, [#allocation4]
    $region49: #{tpu_custom_call.1} parent=1 // pred_fallthru
      _
    // Predicated region
    $region50: #{tpu_custom_call.1} parent=1 // pred_check
      _
    $region51: #{tpu_custom_call.1} parent=1 // pred_check_branch
      %1868 = sbr.rel (0) target = $region53
    $region52: #{tpu_custom_call.1} parent=1 // pred_region
      %1869 = dma.done [#allocation4], 16
    $region53: #{tpu_custom_call.1} parent=1 // pred_fallthru
      _
    %1870 = vsyncpa [#allocation3], 1
    %1871 = vsyncpa [#allocation6], 1
    %1872 = vsyncpa [#allocation9], 1
    %1873 = vsyncpa [#allocation4], 1

</llo_original>
